<compile_context>
chip_gen: v6e
topology: v6e:2x2x1
jax: 0.10.0
libtpu: 0.0.40
codegen_flags: <defaults>
</compile_context>

<pallas_src>
import numpy as np
import jax
import jax.numpy as jnp
from jax import lax
from jax.experimental import pallas as pl
from jax.experimental.pallas import tpu as pltpu


# ----------------------------- Pallas kernel --------------------------------
def _seq_model_kernel(x_ref,      # (T, B, E)   f32  VMEM
                      len_ref,    # (B, 1)      i32  VMEM
                      wih1_ref,   # (E, 4H)     bf16 (g-gate cols pre-scaled by 2)
                      whh1_ref,   # (H, 4H)     bf16 (g-gate cols pre-scaled by 2)
                      b1_ref,     # (1, 4H)     f32  (b_ih_l0 + b_hh_l0, g cols x2)
                      w2_ref,     # (2H, 4H)    bf16 ([Wih2^T; Whh2^T], g cols x2)
                      b2_ref,     # (1, 4H)     f32  (b_ih_l1 + b_hh_l1, g cols x2)
                      wout_ref,   # (H, V)      bf16
                      bout_ref,   # (1, V)      f32
                      out_ref):   # (B, V)      f32
    T, B, E = x_ref.shape
    H = whh1_ref.shape[0]

    whh1 = whh1_ref[...]
    w2 = w2_ref[...]
    b2 = b2_ref[...]

    # ---- hoisted layer-1 input projection: one (T*B, E) @ (E, 4H) matmul ----
    x_flat = x_ref[...].reshape(T * B, E).astype(jnp.bfloat16)
    xproj = (jnp.dot(x_flat, wih1_ref[...], preferred_element_type=jnp.float32)
             + b1_ref[...])                                   # (T*B, 4H) f32

    # lengths broadcast hoisted out of the recurrence
    len_bh = jnp.broadcast_to(len_ref[...], (B, H))           # (B, H) i32

    def gates(g):
        # Cell-gate ("g") columns were pre-scaled by 2 in init_params, so a
        # single full-block sigmoid recovers tanh via 2*sigmoid(2a) - 1.
        s = jax.nn.sigmoid(g)
        i = s[:, 0 * H:1 * H]
        f = s[:, 1 * H:2 * H]
        gg = 2.0 * s[:, 2 * H:3 * H] - 1.0
        o = s[:, 3 * H:4 * H]
        return i, f, gg, o

    zeros = jnp.zeros((B, H), jnp.float32)
    h1, c1, h2, c2, last = zeros, zeros, zeros, zeros, zeros

    # T is static and small -> fully unrolled recurrence with static slicing.
    for t in range(T):
        # layer 1: only the recurrent dot is on the serial path
        g1 = xproj[t * B:(t + 1) * B, :] + jnp.dot(
            h1.astype(jnp.bfloat16), whh1, preferred_element_type=jnp.float32)
        i1, f1, gg1, o1 = gates(g1)
        c1 = f1 * c1 + i1 * gg1
        h1 = o1 * jnp.tanh(c1)

        # TODO(synk): nn.LSTM inter-layer dropout (p=0.3) is train-only; eval forward is identity.
        # layer 2: fused input+recurrent dot
        hcat = jnp.concatenate([h1, h2], axis=1).astype(jnp.bfloat16)   # (B, 2H)
        g2 = jnp.dot(hcat, w2, preferred_element_type=jnp.float32) + b2
        i2, f2, gg2, o2 = gates(g2)
        c2 = f2 * c2 + i2 * gg2
        h2 = o2 * jnp.tanh(c2)

        # keep h2 at t == length-1  (== pack_padded_sequence + gather at len-1)
        last = jnp.where(len_bh == (t + 1), h2, last)

    # GELU (exact, erf-based, matching nn.GELU() default)
    hidden = 0.5 * last * (1.0 + lax.erf(last * np.float32(1.0 / np.sqrt(2.0))))
    # TODO(synk): nn.Dropout is eval-mode identity here (deterministic forward).

    logits = (jnp.dot(hidden.astype(jnp.bfloat16), wout_ref[...],
                      preferred_element_type=jnp.float32)
              + bout_ref[...])                                # (B, V) f32

    # LogSoftmax over dim=1 (vocab axis)
    m = jnp.max(logits, axis=1, keepdims=True)
    shifted = logits - m
    lse = jnp.log(jnp.sum(jnp.exp(shifted), axis=1, keepdims=True))
    out_ref[...] = shifted - lse


# ------------------------------- params --------------------------------------
def init_params(key, vocab_size, embedding_dim, hidden_dim):
    """Deterministic PyTorch-shaped parameters, pre-transposed / fused / scaled
    for the kernel (bf16 matmul weights, f32 biases)."""
    H, E, V = hidden_dim, embedding_dim, vocab_size
    k = 1.0 / np.sqrt(H)
    keys = jax.random.split(key, 10)

    def u(kk, shape):
        return jax.random.uniform(kk, shape, jnp.float32, -k, k)

    # PyTorch shapes: weight_ih_l0 (4H,E), weight_hh_l* (4H,H), biases (4H,)
    w_ih0 = u(keys[0], (4 * H, E)); w_hh0 = u(keys[1], (4 * H, H))
    b_ih0 = u(keys[2], (4 * H,));   b_hh0 = u(keys[3], (4 * H,))
    w_ih1 = u(keys[4], (4 * H, H)); w_hh1 = u(keys[5], (4 * H, H))
    b_ih1 = u(keys[6], (4 * H,));   b_hh1 = u(keys[7], (4 * H,))
    # Linear: weight (V,H), bias (V,)
    w_out = u(keys[8], (V, H));     b_out = u(keys[9], (V,))

    # Scale the cell ("g") gate block (PyTorch gate order i,f,g,o) by 2 so the
    # kernel can use one block sigmoid per cell: tanh(a) == 2*sigmoid(2a) - 1.
    gscale = jnp.concatenate([jnp.ones((H,), jnp.float32),
                              jnp.ones((H,), jnp.float32),
                              2.0 * jnp.ones((H,), jnp.float32),
                              jnp.ones((H,), jnp.float32)])

    def prep_w(w_t):                       # (in, 4H) -> bf16, g cols x2
        return (w_t * gscale[None, :]).astype(jnp.bfloat16)

    def prep_b(b):                         # (4H,) -> (1, 4H) f32, g cols x2
        return (b * gscale).reshape(1, 4 * H).astype(jnp.float32)

    return dict(
        wih1=prep_w(w_ih0.T), whh1=prep_w(w_hh0.T), b1=prep_b(b_ih0 + b_hh0),
        w2=prep_w(jnp.concatenate([w_ih1.T, w_hh1.T], axis=0)),   # (2H, 4H)
        b2=prep_b(b_ih1 + b_hh1),
        wout=w_out.T.astype(jnp.bfloat16),
        bout=b_out.reshape(1, V).astype(jnp.float32),
    )


# ------------------------------- wrapper --------------------------------------
def _forward_core(x_bte, params):
    """All-device forward: lengths, transpose and the Pallas kernel in one jit.
    x_bte: (B, T, E) float32 (batch-first, like the PyTorch module)."""
    x_bte = x_bte.astype(jnp.float32)
    # lengths = (inp.sum(dim=-1) != 0).sum(dim=1)  -- computed on device
    lengths = jnp.sum(jnp.sum(x_bte, axis=-1) != 0, axis=1).astype(jnp.int32)  # (B,)
    x_tbe = jnp.transpose(x_bte, (1, 0, 2))                                    # (T, B, E)

    B = x_bte.shape[0]
    V = params["wout"].shape[1]

    vmem = pl.BlockSpec(memory_space=pltpu.MemorySpace.VMEM)
    out = pl.pallas_call(
        _seq_model_kernel,
        out_shape=jax.ShapeDtypeStruct((B, V), jnp.float32),
        in_specs=[vmem] * 9,
        out_specs=vmem,
    )(x_tbe, lengths[:, None],
      params["wih1"], params["whh1"], params["b1"],
      params["w2"], params["b2"],
      params["wout"], params["bout"])
    return out, lengths


_forward_core_jit = jax.jit(_forward_core)


def sequential_model_forward(x_bte, params):
    out, lengths = _forward_core_jit(x_bte, params)
    keep = np.asarray(lengths) > 0
    if not keep.any():
        raise ValueError("All sequences in the batch have length 0")
    if keep.all():
        return out
    # Drop zero-length rows after the kernel (equivalent: the LSTM is
    # per-sequence, so unused rows never influence the kept ones).
    return out[np.nonzero(keep)[0]]


# --------------------------------- main ---------------------------------------
if __name__ == "__main__":
    # Small shapes: B=8, T=8, E=32, H=32 (4H = 128 gate lanes), V=64
    B, T, E, H, V = 8, 8, 32, 32, 64

    key = jax.random.PRNGKey(0)
    k_x, k_p = jax.random.split(key)

    # Padded batch with per-sequence lengths; valid steps strictly positive so
    # that (sum over E != 0) recovers exactly these lengths.
    seq_lengths = np.array([8, 5, 3, 8, 1, 7, 2, 6], dtype=np.int32)
    x = jnp.abs(jax.random.normal(k_x, (B, T, E), jnp.float32)) + 0.1
    t_idx = np.arange(T)[None, :, None]                      # (1, T, 1)
    valid = (t_idx < seq_lengths[:, None, None]).astype(np.float32)
    x = x * jnp.asarray(valid)                               # zero-pad tail timesteps

    params = init_params(k_p, vocab_size=V, embedding_dim=E, hidden_dim=H)

    logprobs = jax.block_until_ready(sequential_model_forward(x, params))

    assert logprobs.shape == (B, V)
    # rows of LogSoftmax output should exp-sum to ~1
    assert np.allclose(np.exp(np.asarray(logprobs)).sum(axis=1), 1.0, atol=1e-4)
    print("KERNEL_OK")
</pallas_src>

<mosaic_0001>
module attributes {stable_mosaic.version = 11 : i64} {
  func.func @_seq_model_kernel(%arg0: memref<8x8x32xf32, #tpu.memory_space<vmem>>, %arg1: memref<8x1xi32, #tpu.memory_space<vmem>>, %arg2: memref<32x128xbf16, #tpu.memory_space<vmem>>, %arg3: memref<32x128xbf16, #tpu.memory_space<vmem>>, %arg4: memref<1x128xf32, #tpu.memory_space<vmem>>, %arg5: memref<64x128xbf16, #tpu.memory_space<vmem>>, %arg6: memref<1x128xf32, #tpu.memory_space<vmem>>, %arg7: memref<32x64xbf16, #tpu.memory_space<vmem>>, %arg8: memref<1x64xf32, #tpu.memory_space<vmem>>, %arg9: memref<8x64xf32, #tpu.memory_space<vmem>>) attributes {dimension_semantics = [], scalar_prefetch = 0 : i64, scratch_operands = 0 : i64, tpu.core_type = #tpu.core_type<tc>} {
    %c0 = arith.constant 0 : index
    %c0_0 = arith.constant 0 : index
    %0 = vector.load %arg3[%c0, %c0_0] : memref<32x128xbf16, #tpu.memory_space<vmem>>, vector<32x128xbf16>
    %c0_1 = arith.constant 0 : index
    %c0_2 = arith.constant 0 : index
    %1 = vector.load %arg5[%c0_1, %c0_2] : memref<64x128xbf16, #tpu.memory_space<vmem>>, vector<64x128xbf16>
    %c0_3 = arith.constant 0 : index
    %c0_4 = arith.constant 0 : index
    %2 = vector.load %arg6[%c0_3, %c0_4] : memref<1x128xf32, #tpu.memory_space<vmem>>, vector<1x128xf32>
    %c0_5 = arith.constant 0 : index
    %c0_6 = arith.constant 0 : index
    %c0_7 = arith.constant 0 : index
    %3 = vector.load %arg0[%c0_5, %c0_6, %c0_7] : memref<8x8x32xf32, #tpu.memory_space<vmem>>, vector<8x8x32xf32>
    %4 = vector.shape_cast %3 : vector<8x8x32xf32> to vector<64x32xf32>
    %5 = arith.truncf %4 : vector<64x32xf32> to vector<64x32xbf16>
    %c0_8 = arith.constant 0 : index
    %c0_9 = arith.constant 0 : index
    %6 = vector.load %arg2[%c0_8, %c0_9] : memref<32x128xbf16, #tpu.memory_space<vmem>>, vector<32x128xbf16>
    %cst = arith.constant dense<0.000000e+00> : vector<64x128xf32>
    %7 = tpu.matmul %5, %6, %cst {dimension_numbers = #tpu.dot_dimension_numbers<[1], [0], [0], [1], [0, 0, 1, 1], [], []>} : vector<64x32xbf16>, vector<32x128xbf16>, vector<64x128xf32> -> vector<64x128xf32>
    %c0_10 = arith.constant 0 : index
    %c0_11 = arith.constant 0 : index
    %8 = vector.load %arg4[%c0_10, %c0_11] : memref<1x128xf32, #tpu.memory_space<vmem>>, vector<1x128xf32>
    %9 = vector.broadcast %8 : vector<1x128xf32> to vector<64x128xf32>
    %10 = arith.addf %7, %9 : vector<64x128xf32>
    %c0_12 = arith.constant 0 : index
    %c0_13 = arith.constant 0 : index
    %11 = vector.load %arg1[%c0_12, %c0_13] : memref<8x1xi32, #tpu.memory_space<vmem>>, vector<8x1xi32>
    %12 = vector.shape_cast %11 : vector<8x1xi32> to vector<8x1xi32>
    %13 = vector.broadcast %12 : vector<8x1xi32> to vector<8x32xi32>
    %cst_14 = arith.constant 0.000000e+00 : f32
    %14 = vector.broadcast %cst_14 : f32 to vector<8x32xf32>
    %15 = vector.extract_strided_slice %10 {offsets = [0, 0], sizes = [8, 128], strides = [1, 1]} : vector<64x128xf32> to vector<8x128xf32>
    %16 = arith.truncf %14 : vector<8x32xf32> to vector<8x32xbf16>
    %cst_15 = arith.constant dense<0.000000e+00> : vector<8x128xf32>
    %17 = tpu.matmul %16, %0, %cst_15 {dimension_numbers = #tpu.dot_dimension_numbers<[1], [0], [0], [1], [0, 0, 1, 1], [], []>} : vector<8x32xbf16>, vector<32x128xbf16>, vector<8x128xf32> -> vector<8x128xf32>
    %18 = arith.addf %15, %17 : vector<8x128xf32>
    %19 = arith.negf %18 : vector<8x128xf32>
    %20 = math.exp %19 : vector<8x128xf32>
    %cst_16 = arith.constant 1.000000e+00 : f32
    %21 = vector.broadcast %cst_16 : f32 to vector<8x128xf32>
    %22 = arith.addf %21, %20 : vector<8x128xf32>
    %23 = arith.divf %21, %22 : vector<8x128xf32>
    %24 = vector.extract_strided_slice %23 {offsets = [0, 0], sizes = [8, 32], strides = [1, 1]} : vector<8x128xf32> to vector<8x32xf32>
    %25 = vector.extract_strided_slice %23 {offsets = [0, 32], sizes = [8, 32], strides = [1, 1]} : vector<8x128xf32> to vector<8x32xf32>
    %26 = vector.extract_strided_slice %23 {offsets = [0, 64], sizes = [8, 32], strides = [1, 1]} : vector<8x128xf32> to vector<8x32xf32>
    %cst_17 = arith.constant 2.000000e+00 : f32
    %27 = vector.broadcast %cst_17 : f32 to vector<8x32xf32>
    %28 = arith.mulf %27, %26 : vector<8x32xf32>
    %cst_18 = arith.constant 1.000000e+00 : f32
    %29 = vector.broadcast %cst_18 : f32 to vector<8x32xf32>
    %30 = arith.subf %28, %29 : vector<8x32xf32>
    %31 = vector.extract_strided_slice %23 {offsets = [0, 96], sizes = [8, 32], strides = [1, 1]} : vector<8x128xf32> to vector<8x32xf32>
    %32 = arith.mulf %25, %14 : vector<8x32xf32>
    %33 = arith.mulf %24, %30 : vector<8x32xf32>
    %34 = arith.addf %32, %33 : vector<8x32xf32>
    %35 = math.tanh %34 : vector<8x32xf32>
    %36 = arith.mulf %31, %35 : vector<8x32xf32>
    %37 = tpu.concatenate %36, %14 in 1 : vector<8x32xf32>, vector<8x32xf32> -> vector<8x64xf32>
    %38 = arith.truncf %37 : vector<8x64xf32> to vector<8x64xbf16>
    %cst_19 = arith.constant dense<0.000000e+00> : vector<8x128xf32>
    %39 = tpu.matmul %38, %1, %cst_19 {dimension_numbers = #tpu.dot_dimension_numbers<[1], [0], [0], [1], [0, 0, 1, 1], [], []>} : vector<8x64xbf16>, vector<64x128xbf16>, vector<8x128xf32> -> vector<8x128xf32>
    %40 = vector.broadcast %2 : vector<1x128xf32> to vector<8x128xf32>
    %41 = arith.addf %39, %40 : vector<8x128xf32>
    %42 = arith.negf %41 : vector<8x128xf32>
    %43 = math.exp %42 : vector<8x128xf32>
    %cst_20 = arith.constant 1.000000e+00 : f32
    %44 = vector.broadcast %cst_20 : f32 to vector<8x128xf32>
    %45 = arith.addf %44, %43 : vector<8x128xf32>
    %46 = arith.divf %44, %45 : vector<8x128xf32>
    %47 = vector.extract_strided_slice %46 {offsets = [0, 0], sizes = [8, 32], strides = [1, 1]} : vector<8x128xf32> to vector<8x32xf32>
    %48 = vector.extract_strided_slice %46 {offsets = [0, 32], sizes = [8, 32], strides = [1, 1]} : vector<8x128xf32> to vector<8x32xf32>
    %49 = vector.extract_strided_slice %46 {offsets = [0, 64], sizes = [8, 32], strides = [1, 1]} : vector<8x128xf32> to vector<8x32xf32>
    %cst_21 = arith.constant 2.000000e+00 : f32
    %50 = vector.broadcast %cst_21 : f32 to vector<8x32xf32>
    %51 = arith.mulf %50, %49 : vector<8x32xf32>
    %cst_22 = arith.constant 1.000000e+00 : f32
    %52 = vector.broadcast %cst_22 : f32 to vector<8x32xf32>
    %53 = arith.subf %51, %52 : vector<8x32xf32>
    %54 = vector.extract_strided_slice %46 {offsets = [0, 96], sizes = [8, 32], strides = [1, 1]} : vector<8x128xf32> to vector<8x32xf32>
    %55 = arith.mulf %48, %14 : vector<8x32xf32>
    %56 = arith.mulf %47, %53 : vector<8x32xf32>
    %57 = arith.addf %55, %56 : vector<8x32xf32>
    %58 = math.tanh %57 : vector<8x32xf32>
    %59 = arith.mulf %54, %58 : vector<8x32xf32>
    %c1_i32 = arith.constant 1 : i32
    %60 = vector.broadcast %c1_i32 : i32 to vector<8x32xi32>
    %61 = arith.cmpi eq, %13, %60 : vector<8x32xi32>
    %62 = arith.select %61, %59, %14 : vector<8x32xi1>, vector<8x32xf32>
    %63 = vector.extract_strided_slice %10 {offsets = [8, 0], sizes = [8, 128], strides = [1, 1]} : vector<64x128xf32> to vector<8x128xf32>
    %64 = arith.truncf %36 : vector<8x32xf32> to vector<8x32xbf16>
    %cst_23 = arith.constant dense<0.000000e+00> : vector<8x128xf32>
    %65 = tpu.matmul %64, %0, %cst_23 {dimension_numbers = #tpu.dot_dimension_numbers<[1], [0], [0], [1], [0, 0, 1, 1], [], []>} : vector<8x32xbf16>, vector<32x128xbf16>, vector<8x128xf32> -> vector<8x128xf32>
    %66 = arith.addf %63, %65 : vector<8x128xf32>
    %67 = arith.negf %66 : vector<8x128xf32>
    %68 = math.exp %67 : vector<8x128xf32>
    %cst_24 = arith.constant 1.000000e+00 : f32
    %69 = vector.broadcast %cst_24 : f32 to vector<8x128xf32>
    %70 = arith.addf %69, %68 : vector<8x128xf32>
    %71 = arith.divf %69, %70 : vector<8x128xf32>
    %72 = vector.extract_strided_slice %71 {offsets = [0, 0], sizes = [8, 32], strides = [1, 1]} : vector<8x128xf32> to vector<8x32xf32>
    %73 = vector.extract_strided_slice %71 {offsets = [0, 32], sizes = [8, 32], strides = [1, 1]} : vector<8x128xf32> to vector<8x32xf32>
    %74 = vector.extract_strided_slice %71 {offsets = [0, 64], sizes = [8, 32], strides = [1, 1]} : vector<8x128xf32> to vector<8x32xf32>
    %cst_25 = arith.constant 2.000000e+00 : f32
    %75 = vector.broadcast %cst_25 : f32 to vector<8x32xf32>
    %76 = arith.mulf %75, %74 : vector<8x32xf32>
    %cst_26 = arith.constant 1.000000e+00 : f32
    %77 = vector.broadcast %cst_26 : f32 to vector<8x32xf32>
    %78 = arith.subf %76, %77 : vector<8x32xf32>
    %79 = vector.extract_strided_slice %71 {offsets = [0, 96], sizes = [8, 32], strides = [1, 1]} : vector<8x128xf32> to vector<8x32xf32>
    %80 = arith.mulf %73, %34 : vector<8x32xf32>
    %81 = arith.mulf %72, %78 : vector<8x32xf32>
    %82 = arith.addf %80, %81 : vector<8x32xf32>
    %83 = math.tanh %82 : vector<8x32xf32>
    %84 = arith.mulf %79, %83 : vector<8x32xf32>
    %85 = tpu.concatenate %84, %59 in 1 : vector<8x32xf32>, vector<8x32xf32> -> vector<8x64xf32>
    %86 = arith.truncf %85 : vector<8x64xf32> to vector<8x64xbf16>
    %cst_27 = arith.constant dense<0.000000e+00> : vector<8x128xf32>
    %87 = tpu.matmul %86, %1, %cst_27 {dimension_numbers = #tpu.dot_dimension_numbers<[1], [0], [0], [1], [0, 0, 1, 1], [], []>} : vector<8x64xbf16>, vector<64x128xbf16>, vector<8x128xf32> -> vector<8x128xf32>
    %88 = vector.broadcast %2 : vector<1x128xf32> to vector<8x128xf32>
    %89 = arith.addf %87, %88 : vector<8x128xf32>
    %90 = arith.negf %89 : vector<8x128xf32>
    %91 = math.exp %90 : vector<8x128xf32>
    %cst_28 = arith.constant 1.000000e+00 : f32
    %92 = vector.broadcast %cst_28 : f32 to vector<8x128xf32>
    %93 = arith.addf %92, %91 : vector<8x128xf32>
    %94 = arith.divf %92, %93 : vector<8x128xf32>
    %95 = vector.extract_strided_slice %94 {offsets = [0, 0], sizes = [8, 32], strides = [1, 1]} : vector<8x128xf32> to vector<8x32xf32>
    %96 = vector.extract_strided_slice %94 {offsets = [0, 32], sizes = [8, 32], strides = [1, 1]} : vector<8x128xf32> to vector<8x32xf32>
    %97 = vector.extract_strided_slice %94 {offsets = [0, 64], sizes = [8, 32], strides = [1, 1]} : vector<8x128xf32> to vector<8x32xf32>
    %cst_29 = arith.constant 2.000000e+00 : f32
    %98 = vector.broadcast %cst_29 : f32 to vector<8x32xf32>
    %99 = arith.mulf %98, %97 : vector<8x32xf32>
    %cst_30 = arith.constant 1.000000e+00 : f32
    %100 = vector.broadcast %cst_30 : f32 to vector<8x32xf32>
    %101 = arith.subf %99, %100 : vector<8x32xf32>
    %102 = vector.extract_strided_slice %94 {offsets = [0, 96], sizes = [8, 32], strides = [1, 1]} : vector<8x128xf32> to vector<8x32xf32>
    %103 = arith.mulf %96, %57 : vector<8x32xf32>
    %104 = arith.mulf %95, %101 : vector<8x32xf32>
    %105 = arith.addf %103, %104 : vector<8x32xf32>
    %106 = math.tanh %105 : vector<8x32xf32>
    %107 = arith.mulf %102, %106 : vector<8x32xf32>
    %c2_i32 = arith.constant 2 : i32
    %108 = vector.broadcast %c2_i32 : i32 to vector<8x32xi32>
    %109 = arith.cmpi eq, %13, %108 : vector<8x32xi32>
    %110 = arith.select %109, %107, %62 : vector<8x32xi1>, vector<8x32xf32>
    %111 = vector.extract_strided_slice %10 {offsets = [16, 0], sizes = [8, 128], strides = [1, 1]} : vector<64x128xf32> to vector<8x128xf32>
    %112 = arith.truncf %84 : vector<8x32xf32> to vector<8x32xbf16>
    %cst_31 = arith.constant dense<0.000000e+00> : vector<8x128xf32>
    %113 = tpu.matmul %112, %0, %cst_31 {dimension_numbers = #tpu.dot_dimension_numbers<[1], [0], [0], [1], [0, 0, 1, 1], [], []>} : vector<8x32xbf16>, vector<32x128xbf16>, vector<8x128xf32> -> vector<8x128xf32>
    %114 = arith.addf %111, %113 : vector<8x128xf32>
    %115 = arith.negf %114 : vector<8x128xf32>
    %116 = math.exp %115 : vector<8x128xf32>
    %cst_32 = arith.constant 1.000000e+00 : f32
    %117 = vector.broadcast %cst_32 : f32 to vector<8x128xf32>
    %118 = arith.addf %117, %116 : vector<8x128xf32>
    %119 = arith.divf %117, %118 : vector<8x128xf32>
    %120 = vector.extract_strided_slice %119 {offsets = [0, 0], sizes = [8, 32], strides = [1, 1]} : vector<8x128xf32> to vector<8x32xf32>
    %121 = vector.extract_strided_slice %119 {offsets = [0, 32], sizes = [8, 32], strides = [1, 1]} : vector<8x128xf32> to vector<8x32xf32>
    %122 = vector.extract_strided_slice %119 {offsets = [0, 64], sizes = [8, 32], strides = [1, 1]} : vector<8x128xf32> to vector<8x32xf32>
    %cst_33 = arith.constant 2.000000e+00 : f32
    %123 = vector.broadcast %cst_33 : f32 to vector<8x32xf32>
    %124 = arith.mulf %123, %122 : vector<8x32xf32>
    %cst_34 = arith.constant 1.000000e+00 : f32
    %125 = vector.broadcast %cst_34 : f32 to vector<8x32xf32>
    %126 = arith.subf %124, %125 : vector<8x32xf32>
    %127 = vector.extract_strided_slice %119 {offsets = [0, 96], sizes = [8, 32], strides = [1, 1]} : vector<8x128xf32> to vector<8x32xf32>
    %128 = arith.mulf %121, %82 : vector<8x32xf32>
    %129 = arith.mulf %120, %126 : vector<8x32xf32>
    %130 = arith.addf %128, %129 : vector<8x32xf32>
    %131 = math.tanh %130 : vector<8x32xf32>
    %132 = arith.mulf %127, %131 : vector<8x32xf32>
    %133 = tpu.concatenate %132, %107 in 1 : vector<8x32xf32>, vector<8x32xf32> -> vector<8x64xf32>
    %134 = arith.truncf %133 : vector<8x64xf32> to vector<8x64xbf16>
    %cst_35 = arith.constant dense<0.000000e+00> : vector<8x128xf32>
    %135 = tpu.matmul %134, %1, %cst_35 {dimension_numbers = #tpu.dot_dimension_numbers<[1], [0], [0], [1], [0, 0, 1, 1], [], []>} : vector<8x64xbf16>, vector<64x128xbf16>, vector<8x128xf32> -> vector<8x128xf32>
    %136 = vector.broadcast %2 : vector<1x128xf32> to vector<8x128xf32>
    %137 = arith.addf %135, %136 : vector<8x128xf32>
    %138 = arith.negf %137 : vector<8x128xf32>
    %139 = math.exp %138 : vector<8x128xf32>
    %cst_36 = arith.constant 1.000000e+00 : f32
    %140 = vector.broadcast %cst_36 : f32 to vector<8x128xf32>
    %141 = arith.addf %140, %139 : vector<8x128xf32>
    %142 = arith.divf %140, %141 : vector<8x128xf32>
    %143 = vector.extract_strided_slice %142 {offsets = [0, 0], sizes = [8, 32], strides = [1, 1]} : vector<8x128xf32> to vector<8x32xf32>
    %144 = vector.extract_strided_slice %142 {offsets = [0, 32], sizes = [8, 32], strides = [1, 1]} : vector<8x128xf32> to vector<8x32xf32>
    %145 = vector.extract_strided_slice %142 {offsets = [0, 64], sizes = [8, 32], strides = [1, 1]} : vector<8x128xf32> to vector<8x32xf32>
    %cst_37 = arith.constant 2.000000e+00 : f32
    %146 = vector.broadcast %cst_37 : f32 to vector<8x32xf32>
    %147 = arith.mulf %146, %145 : vector<8x32xf32>
    %cst_38 = arith.constant 1.000000e+00 : f32
    %148 = vector.broadcast %cst_38 : f32 to vector<8x32xf32>
    %149 = arith.subf %147, %148 : vector<8x32xf32>
    %150 = vector.extract_strided_slice %142 {offsets = [0, 96], sizes = [8, 32], strides = [1, 1]} : vector<8x128xf32> to vector<8x32xf32>
    %151 = arith.mulf %144, %105 : vector<8x32xf32>
    %152 = arith.mulf %143, %149 : vector<8x32xf32>
    %153 = arith.addf %151, %152 : vector<8x32xf32>
    %154 = math.tanh %153 : vector<8x32xf32>
    %155 = arith.mulf %150, %154 : vector<8x32xf32>
    %c3_i32 = arith.constant 3 : i32
    %156 = vector.broadcast %c3_i32 : i32 to vector<8x32xi32>
    %157 = arith.cmpi eq, %13, %156 : vector<8x32xi32>
    %158 = arith.select %157, %155, %110 : vector<8x32xi1>, vector<8x32xf32>
    %159 = vector.extract_strided_slice %10 {offsets = [24, 0], sizes = [8, 128], strides = [1, 1]} : vector<64x128xf32> to vector<8x128xf32>
    %160 = arith.truncf %132 : vector<8x32xf32> to vector<8x32xbf16>
    %cst_39 = arith.constant dense<0.000000e+00> : vector<8x128xf32>
    %161 = tpu.matmul %160, %0, %cst_39 {dimension_numbers = #tpu.dot_dimension_numbers<[1], [0], [0], [1], [0, 0, 1, 1], [], []>} : vector<8x32xbf16>, vector<32x128xbf16>, vector<8x128xf32> -> vector<8x128xf32>
    %162 = arith.addf %159, %161 : vector<8x128xf32>
    %163 = arith.negf %162 : vector<8x128xf32>
    %164 = math.exp %163 : vector<8x128xf32>
    %cst_40 = arith.constant 1.000000e+00 : f32
    %165 = vector.broadcast %cst_40 : f32 to vector<8x128xf32>
    %166 = arith.addf %165, %164 : vector<8x128xf32>
    %167 = arith.divf %165, %166 : vector<8x128xf32>
    %168 = vector.extract_strided_slice %167 {offsets = [0, 0], sizes = [8, 32], strides = [1, 1]} : vector<8x128xf32> to vector<8x32xf32>
    %169 = vector.extract_strided_slice %167 {offsets = [0, 32], sizes = [8, 32], strides = [1, 1]} : vector<8x128xf32> to vector<8x32xf32>
    %170 = vector.extract_strided_slice %167 {offsets = [0, 64], sizes = [8, 32], strides = [1, 1]} : vector<8x128xf32> to vector<8x32xf32>
    %cst_41 = arith.constant 2.000000e+00 : f32
    %171 = vector.broadcast %cst_41 : f32 to vector<8x32xf32>
    %172 = arith.mulf %171, %170 : vector<8x32xf32>
    %cst_42 = arith.constant 1.000000e+00 : f32
    %173 = vector.broadcast %cst_42 : f32 to vector<8x32xf32>
    %174 = arith.subf %172, %173 : vector<8x32xf32>
    %175 = vector.extract_strided_slice %167 {offsets = [0, 96], sizes = [8, 32], strides = [1, 1]} : vector<8x128xf32> to vector<8x32xf32>
    %176 = arith.mulf %169, %130 : vector<8x32xf32>
    %177 = arith.mulf %168, %174 : vector<8x32xf32>
    %178 = arith.addf %176, %177 : vector<8x32xf32>
    %179 = math.tanh %178 : vector<8x32xf32>
    %180 = arith.mulf %175, %179 : vector<8x32xf32>
    %181 = tpu.concatenate %180, %155 in 1 : vector<8x32xf32>, vector<8x32xf32> -> vector<8x64xf32>
    %182 = arith.truncf %181 : vector<8x64xf32> to vector<8x64xbf16>
    %cst_43 = arith.constant dense<0.000000e+00> : vector<8x128xf32>
    %183 = tpu.matmul %182, %1, %cst_43 {dimension_numbers = #tpu.dot_dimension_numbers<[1], [0], [0], [1], [0, 0, 1, 1], [], []>} : vector<8x64xbf16>, vector<64x128xbf16>, vector<8x128xf32> -> vector<8x128xf32>
    %184 = vector.broadcast %2 : vector<1x128xf32> to vector<8x128xf32>
    %185 = arith.addf %183, %184 : vector<8x128xf32>
    %186 = arith.negf %185 : vector<8x128xf32>
    %187 = math.exp %186 : vector<8x128xf32>
    %cst_44 = arith.constant 1.000000e+00 : f32
    %188 = vector.broadcast %cst_44 : f32 to vector<8x128xf32>
    %189 = arith.addf %188, %187 : vector<8x128xf32>
    %190 = arith.divf %188, %189 : vector<8x128xf32>
    %191 = vector.extract_strided_slice %190 {offsets = [0, 0], sizes = [8, 32], strides = [1, 1]} : vector<8x128xf32> to vector<8x32xf32>
    %192 = vector.extract_strided_slice %190 {offsets = [0, 32], sizes = [8, 32], strides = [1, 1]} : vector<8x128xf32> to vector<8x32xf32>
    %193 = vector.extract_strided_slice %190 {offsets = [0, 64], sizes = [8, 32], strides = [1, 1]} : vector<8x128xf32> to vector<8x32xf32>
    %cst_45 = arith.constant 2.000000e+00 : f32
    %194 = vector.broadcast %cst_45 : f32 to vector<8x32xf32>
    %195 = arith.mulf %194, %193 : vector<8x32xf32>
    %cst_46 = arith.constant 1.000000e+00 : f32
    %196 = vector.broadcast %cst_46 : f32 to vector<8x32xf32>
    %197 = arith.subf %195, %196 : vector<8x32xf32>
    %198 = vector.extract_strided_slice %190 {offsets = [0, 96], sizes = [8, 32], strides = [1, 1]} : vector<8x128xf32> to vector<8x32xf32>
    %199 = arith.mulf %192, %153 : vector<8x32xf32>
    %200 = arith.mulf %191, %197 : vector<8x32xf32>
    %201 = arith.addf %199, %200 : vector<8x32xf32>
    %202 = math.tanh %201 : vector<8x32xf32>
    %203 = arith.mulf %198, %202 : vector<8x32xf32>
    %c4_i32 = arith.constant 4 : i32
    %204 = vector.broadcast %c4_i32 : i32 to vector<8x32xi32>
    %205 = arith.cmpi eq, %13, %204 : vector<8x32xi32>
    %206 = arith.select %205, %203, %158 : vector<8x32xi1>, vector<8x32xf32>
    %207 = vector.extract_strided_slice %10 {offsets = [32, 0], sizes = [8, 128], strides = [1, 1]} : vector<64x128xf32> to vector<8x128xf32>
    %208 = arith.truncf %180 : vector<8x32xf32> to vector<8x32xbf16>
    %cst_47 = arith.constant dense<0.000000e+00> : vector<8x128xf32>
    %209 = tpu.matmul %208, %0, %cst_47 {dimension_numbers = #tpu.dot_dimension_numbers<[1], [0], [0], [1], [0, 0, 1, 1], [], []>} : vector<8x32xbf16>, vector<32x128xbf16>, vector<8x128xf32> -> vector<8x128xf32>
    %210 = arith.addf %207, %209 : vector<8x128xf32>
    %211 = arith.negf %210 : vector<8x128xf32>
    %212 = math.exp %211 : vector<8x128xf32>
    %cst_48 = arith.constant 1.000000e+00 : f32
    %213 = vector.broadcast %cst_48 : f32 to vector<8x128xf32>
    %214 = arith.addf %213, %212 : vector<8x128xf32>
    %215 = arith.divf %213, %214 : vector<8x128xf32>
    %216 = vector.extract_strided_slice %215 {offsets = [0, 0], sizes = [8, 32], strides = [1, 1]} : vector<8x128xf32> to vector<8x32xf32>
    %217 = vector.extract_strided_slice %215 {offsets = [0, 32], sizes = [8, 32], strides = [1, 1]} : vector<8x128xf32> to vector<8x32xf32>
    %218 = vector.extract_strided_slice %215 {offsets = [0, 64], sizes = [8, 32], strides = [1, 1]} : vector<8x128xf32> to vector<8x32xf32>
    %cst_49 = arith.constant 2.000000e+00 : f32
    %219 = vector.broadcast %cst_49 : f32 to vector<8x32xf32>
    %220 = arith.mulf %219, %218 : vector<8x32xf32>
    %cst_50 = arith.constant 1.000000e+00 : f32
    %221 = vector.broadcast %cst_50 : f32 to vector<8x32xf32>
    %222 = arith.subf %220, %221 : vector<8x32xf32>
    %223 = vector.extract_strided_slice %215 {offsets = [0, 96], sizes = [8, 32], strides = [1, 1]} : vector<8x128xf32> to vector<8x32xf32>
    %224 = arith.mulf %217, %178 : vector<8x32xf32>
    %225 = arith.mulf %216, %222 : vector<8x32xf32>
    %226 = arith.addf %224, %225 : vector<8x32xf32>
    %227 = math.tanh %226 : vector<8x32xf32>
    %228 = arith.mulf %223, %227 : vector<8x32xf32>
    %229 = tpu.concatenate %228, %203 in 1 : vector<8x32xf32>, vector<8x32xf32> -> vector<8x64xf32>
    %230 = arith.truncf %229 : vector<8x64xf32> to vector<8x64xbf16>
    %cst_51 = arith.constant dense<0.000000e+00> : vector<8x128xf32>
    %231 = tpu.matmul %230, %1, %cst_51 {dimension_numbers = #tpu.dot_dimension_numbers<[1], [0], [0], [1], [0, 0, 1, 1], [], []>} : vector<8x64xbf16>, vector<64x128xbf16>, vector<8x128xf32> -> vector<8x128xf32>
    %232 = vector.broadcast %2 : vector<1x128xf32> to vector<8x128xf32>
    %233 = arith.addf %231, %232 : vector<8x128xf32>
    %234 = arith.negf %233 : vector<8x128xf32>
    %235 = math.exp %234 : vector<8x128xf32>
    %cst_52 = arith.constant 1.000000e+00 : f32
    %236 = vector.broadcast %cst_52 : f32 to vector<8x128xf32>
    %237 = arith.addf %236, %235 : vector<8x128xf32>
    %238 = arith.divf %236, %237 : vector<8x128xf32>
    %239 = vector.extract_strided_slice %238 {offsets = [0, 0], sizes = [8, 32], strides = [1, 1]} : vector<8x128xf32> to vector<8x32xf32>
    %240 = vector.extract_strided_slice %238 {offsets = [0, 32], sizes = [8, 32], strides = [1, 1]} : vector<8x128xf32> to vector<8x32xf32>
    %241 = vector.extract_strided_slice %238 {offsets = [0, 64], sizes = [8, 32], strides = [1, 1]} : vector<8x128xf32> to vector<8x32xf32>
    %cst_53 = arith.constant 2.000000e+00 : f32
    %242 = vector.broadcast %cst_53 : f32 to vector<8x32xf32>
    %243 = arith.mulf %242, %241 : vector<8x32xf32>
    %cst_54 = arith.constant 1.000000e+00 : f32
    %244 = vector.broadcast %cst_54 : f32 to vector<8x32xf32>
    %245 = arith.subf %243, %244 : vector<8x32xf32>
    %246 = vector.extract_strided_slice %238 {offsets = [0, 96], sizes = [8, 32], strides = [1, 1]} : vector<8x128xf32> to vector<8x32xf32>
    %247 = arith.mulf %240, %201 : vector<8x32xf32>
    %248 = arith.mulf %239, %245 : vector<8x32xf32>
    %249 = arith.addf %247, %248 : vector<8x32xf32>
    %250 = math.tanh %249 : vector<8x32xf32>
    %251 = arith.mulf %246, %250 : vector<8x32xf32>
    %c5_i32 = arith.constant 5 : i32
    %252 = vector.broadcast %c5_i32 : i32 to vector<8x32xi32>
    %253 = arith.cmpi eq, %13, %252 : vector<8x32xi32>
    %254 = arith.select %253, %251, %206 : vector<8x32xi1>, vector<8x32xf32>
    %255 = vector.extract_strided_slice %10 {offsets = [40, 0], sizes = [8, 128], strides = [1, 1]} : vector<64x128xf32> to vector<8x128xf32>
    %256 = arith.truncf %228 : vector<8x32xf32> to vector<8x32xbf16>
    %cst_55 = arith.constant dense<0.000000e+00> : vector<8x128xf32>
    %257 = tpu.matmul %256, %0, %cst_55 {dimension_numbers = #tpu.dot_dimension_numbers<[1], [0], [0], [1], [0, 0, 1, 1], [], []>} : vector<8x32xbf16>, vector<32x128xbf16>, vector<8x128xf32> -> vector<8x128xf32>
    %258 = arith.addf %255, %257 : vector<8x128xf32>
    %259 = arith.negf %258 : vector<8x128xf32>
    %260 = math.exp %259 : vector<8x128xf32>
    %cst_56 = arith.constant 1.000000e+00 : f32
    %261 = vector.broadcast %cst_56 : f32 to vector<8x128xf32>
    %262 = arith.addf %261, %260 : vector<8x128xf32>
    %263 = arith.divf %261, %262 : vector<8x128xf32>
    %264 = vector.extract_strided_slice %263 {offsets = [0, 0], sizes = [8, 32], strides = [1, 1]} : vector<8x128xf32> to vector<8x32xf32>
    %265 = vector.extract_strided_slice %263 {offsets = [0, 32], sizes = [8, 32], strides = [1, 1]} : vector<8x128xf32> to vector<8x32xf32>
    %266 = vector.extract_strided_slice %263 {offsets = [0, 64], sizes = [8, 32], strides = [1, 1]} : vector<8x128xf32> to vector<8x32xf32>
    %cst_57 = arith.constant 2.000000e+00 : f32
    %267 = vector.broadcast %cst_57 : f32 to vector<8x32xf32>
    %268 = arith.mulf %267, %266 : vector<8x32xf32>
    %cst_58 = arith.constant 1.000000e+00 : f32
    %269 = vector.broadcast %cst_58 : f32 to vector<8x32xf32>
    %270 = arith.subf %268, %269 : vector<8x32xf32>
    %271 = vector.extract_strided_slice %263 {offsets = [0, 96], sizes = [8, 32], strides = [1, 1]} : vector<8x128xf32> to vector<8x32xf32>
    %272 = arith.mulf %265, %226 : vector<8x32xf32>
    %273 = arith.mulf %264, %270 : vector<8x32xf32>
    %274 = arith.addf %272, %273 : vector<8x32xf32>
    %275 = math.tanh %274 : vector<8x32xf32>
    %276 = arith.mulf %271, %275 : vector<8x32xf32>
    %277 = tpu.concatenate %276, %251 in 1 : vector<8x32xf32>, vector<8x32xf32> -> vector<8x64xf32>
    %278 = arith.truncf %277 : vector<8x64xf32> to vector<8x64xbf16>
    %cst_59 = arith.constant dense<0.000000e+00> : vector<8x128xf32>
    %279 = tpu.matmul %278, %1, %cst_59 {dimension_numbers = #tpu.dot_dimension_numbers<[1], [0], [0], [1], [0, 0, 1, 1], [], []>} : vector<8x64xbf16>, vector<64x128xbf16>, vector<8x128xf32> -> vector<8x128xf32>
    %280 = vector.broadcast %2 : vector<1x128xf32> to vector<8x128xf32>
    %281 = arith.addf %279, %280 : vector<8x128xf32>
    %282 = arith.negf %281 : vector<8x128xf32>
    %283 = math.exp %282 : vector<8x128xf32>
    %cst_60 = arith.constant 1.000000e+00 : f32
    %284 = vector.broadcast %cst_60 : f32 to vector<8x128xf32>
    %285 = arith.addf %284, %283 : vector<8x128xf32>
    %286 = arith.divf %284, %285 : vector<8x128xf32>
    %287 = vector.extract_strided_slice %286 {offsets = [0, 0], sizes = [8, 32], strides = [1, 1]} : vector<8x128xf32> to vector<8x32xf32>
    %288 = vector.extract_strided_slice %286 {offsets = [0, 32], sizes = [8, 32], strides = [1, 1]} : vector<8x128xf32> to vector<8x32xf32>
    %289 = vector.extract_strided_slice %286 {offsets = [0, 64], sizes = [8, 32], strides = [1, 1]} : vector<8x128xf32> to vector<8x32xf32>
    %cst_61 = arith.constant 2.000000e+00 : f32
    %290 = vector.broadcast %cst_61 : f32 to vector<8x32xf32>
    %291 = arith.mulf %290, %289 : vector<8x32xf32>
    %cst_62 = arith.constant 1.000000e+00 : f32
    %292 = vector.broadcast %cst_62 : f32 to vector<8x32xf32>
    %293 = arith.subf %291, %292 : vector<8x32xf32>
    %294 = vector.extract_strided_slice %286 {offsets = [0, 96], sizes = [8, 32], strides = [1, 1]} : vector<8x128xf32> to vector<8x32xf32>
    %295 = arith.mulf %288, %249 : vector<8x32xf32>
    %296 = arith.mulf %287, %293 : vector<8x32xf32>
    %297 = arith.addf %295, %296 : vector<8x32xf32>
    %298 = math.tanh %297 : vector<8x32xf32>
    %299 = arith.mulf %294, %298 : vector<8x32xf32>
    %c6_i32 = arith.constant 6 : i32
    %300 = vector.broadcast %c6_i32 : i32 to vector<8x32xi32>
    %301 = arith.cmpi eq, %13, %300 : vector<8x32xi32>
    %302 = arith.select %301, %299, %254 : vector<8x32xi1>, vector<8x32xf32>
    %303 = vector.extract_strided_slice %10 {offsets = [48, 0], sizes = [8, 128], strides = [1, 1]} : vector<64x128xf32> to vector<8x128xf32>
    %304 = arith.truncf %276 : vector<8x32xf32> to vector<8x32xbf16>
    %cst_63 = arith.constant dense<0.000000e+00> : vector<8x128xf32>
    %305 = tpu.matmul %304, %0, %cst_63 {dimension_numbers = #tpu.dot_dimension_numbers<[1], [0], [0], [1], [0, 0, 1, 1], [], []>} : vector<8x32xbf16>, vector<32x128xbf16>, vector<8x128xf32> -> vector<8x128xf32>
    %306 = arith.addf %303, %305 : vector<8x128xf32>
    %307 = arith.negf %306 : vector<8x128xf32>
    %308 = math.exp %307 : vector<8x128xf32>
    %cst_64 = arith.constant 1.000000e+00 : f32
    %309 = vector.broadcast %cst_64 : f32 to vector<8x128xf32>
    %310 = arith.addf %309, %308 : vector<8x128xf32>
    %311 = arith.divf %309, %310 : vector<8x128xf32>
    %312 = vector.extract_strided_slice %311 {offsets = [0, 0], sizes = [8, 32], strides = [1, 1]} : vector<8x128xf32> to vector<8x32xf32>
    %313 = vector.extract_strided_slice %311 {offsets = [0, 32], sizes = [8, 32], strides = [1, 1]} : vector<8x128xf32> to vector<8x32xf32>
    %314 = vector.extract_strided_slice %311 {offsets = [0, 64], sizes = [8, 32], strides = [1, 1]} : vector<8x128xf32> to vector<8x32xf32>
    %cst_65 = arith.constant 2.000000e+00 : f32
    %315 = vector.broadcast %cst_65 : f32 to vector<8x32xf32>
    %316 = arith.mulf %315, %314 : vector<8x32xf32>
    %cst_66 = arith.constant 1.000000e+00 : f32
    %317 = vector.broadcast %cst_66 : f32 to vector<8x32xf32>
    %318 = arith.subf %316, %317 : vector<8x32xf32>
    %319 = vector.extract_strided_slice %311 {offsets = [0, 96], sizes = [8, 32], strides = [1, 1]} : vector<8x128xf32> to vector<8x32xf32>
    %320 = arith.mulf %313, %274 : vector<8x32xf32>
    %321 = arith.mulf %312, %318 : vector<8x32xf32>
    %322 = arith.addf %320, %321 : vector<8x32xf32>
    %323 = math.tanh %322 : vector<8x32xf32>
    %324 = arith.mulf %319, %323 : vector<8x32xf32>
    %325 = tpu.concatenate %324, %299 in 1 : vector<8x32xf32>, vector<8x32xf32> -> vector<8x64xf32>
    %326 = arith.truncf %325 : vector<8x64xf32> to vector<8x64xbf16>
    %cst_67 = arith.constant dense<0.000000e+00> : vector<8x128xf32>
    %327 = tpu.matmul %326, %1, %cst_67 {dimension_numbers = #tpu.dot_dimension_numbers<[1], [0], [0], [1], [0, 0, 1, 1], [], []>} : vector<8x64xbf16>, vector<64x128xbf16>, vector<8x128xf32> -> vector<8x128xf32>
    %328 = vector.broadcast %2 : vector<1x128xf32> to vector<8x128xf32>
    %329 = arith.addf %327, %328 : vector<8x128xf32>
    %330 = arith.negf %329 : vector<8x128xf32>
    %331 = math.exp %330 : vector<8x128xf32>
    %cst_68 = arith.constant 1.000000e+00 : f32
    %332 = vector.broadcast %cst_68 : f32 to vector<8x128xf32>
    %333 = arith.addf %332, %331 : vector<8x128xf32>
    %334 = arith.divf %332, %333 : vector<8x128xf32>
    %335 = vector.extract_strided_slice %334 {offsets = [0, 0], sizes = [8, 32], strides = [1, 1]} : vector<8x128xf32> to vector<8x32xf32>
    %336 = vector.extract_strided_slice %334 {offsets = [0, 32], sizes = [8, 32], strides = [1, 1]} : vector<8x128xf32> to vector<8x32xf32>
    %337 = vector.extract_strided_slice %334 {offsets = [0, 64], sizes = [8, 32], strides = [1, 1]} : vector<8x128xf32> to vector<8x32xf32>
    %cst_69 = arith.constant 2.000000e+00 : f32
    %338 = vector.broadcast %cst_69 : f32 to vector<8x32xf32>
    %339 = arith.mulf %338, %337 : vector<8x32xf32>
    %cst_70 = arith.constant 1.000000e+00 : f32
    %340 = vector.broadcast %cst_70 : f32 to vector<8x32xf32>
    %341 = arith.subf %339, %340 : vector<8x32xf32>
    %342 = vector.extract_strided_slice %334 {offsets = [0, 96], sizes = [8, 32], strides = [1, 1]} : vector<8x128xf32> to vector<8x32xf32>
    %343 = arith.mulf %336, %297 : vector<8x32xf32>
    %344 = arith.mulf %335, %341 : vector<8x32xf32>
    %345 = arith.addf %343, %344 : vector<8x32xf32>
    %346 = math.tanh %345 : vector<8x32xf32>
    %347 = arith.mulf %342, %346 : vector<8x32xf32>
    %c7_i32 = arith.constant 7 : i32
    %348 = vector.broadcast %c7_i32 : i32 to vector<8x32xi32>
    %349 = arith.cmpi eq, %13, %348 : vector<8x32xi32>
    %350 = arith.select %349, %347, %302 : vector<8x32xi1>, vector<8x32xf32>
    %351 = vector.extract_strided_slice %10 {offsets = [56, 0], sizes = [8, 128], strides = [1, 1]} : vector<64x128xf32> to vector<8x128xf32>
    %352 = arith.truncf %324 : vector<8x32xf32> to vector<8x32xbf16>
    %cst_71 = arith.constant dense<0.000000e+00> : vector<8x128xf32>
    %353 = tpu.matmul %352, %0, %cst_71 {dimension_numbers = #tpu.dot_dimension_numbers<[1], [0], [0], [1], [0, 0, 1, 1], [], []>} : vector<8x32xbf16>, vector<32x128xbf16>, vector<8x128xf32> -> vector<8x128xf32>
    %354 = arith.addf %351, %353 : vector<8x128xf32>
    %355 = arith.negf %354 : vector<8x128xf32>
    %356 = math.exp %355 : vector<8x128xf32>
    %cst_72 = arith.constant 1.000000e+00 : f32
    %357 = vector.broadcast %cst_72 : f32 to vector<8x128xf32>
    %358 = arith.addf %357, %356 : vector<8x128xf32>
    %359 = arith.divf %357, %358 : vector<8x128xf32>
    %360 = vector.extract_strided_slice %359 {offsets = [0, 0], sizes = [8, 32], strides = [1, 1]} : vector<8x128xf32> to vector<8x32xf32>
    %361 = vector.extract_strided_slice %359 {offsets = [0, 32], sizes = [8, 32], strides = [1, 1]} : vector<8x128xf32> to vector<8x32xf32>
    %362 = vector.extract_strided_slice %359 {offsets = [0, 64], sizes = [8, 32], strides = [1, 1]} : vector<8x128xf32> to vector<8x32xf32>
    %cst_73 = arith.constant 2.000000e+00 : f32
    %363 = vector.broadcast %cst_73 : f32 to vector<8x32xf32>
    %364 = arith.mulf %363, %362 : vector<8x32xf32>
    %cst_74 = arith.constant 1.000000e+00 : f32
    %365 = vector.broadcast %cst_74 : f32 to vector<8x32xf32>
    %366 = arith.subf %364, %365 : vector<8x32xf32>
    %367 = vector.extract_strided_slice %359 {offsets = [0, 96], sizes = [8, 32], strides = [1, 1]} : vector<8x128xf32> to vector<8x32xf32>
    %368 = arith.mulf %361, %322 : vector<8x32xf32>
    %369 = arith.mulf %360, %366 : vector<8x32xf32>
    %370 = arith.addf %368, %369 : vector<8x32xf32>
    %371 = math.tanh %370 : vector<8x32xf32>
    %372 = arith.mulf %367, %371 : vector<8x32xf32>
    %373 = tpu.concatenate %372, %347 in 1 : vector<8x32xf32>, vector<8x32xf32> -> vector<8x64xf32>
    %374 = arith.truncf %373 : vector<8x64xf32> to vector<8x64xbf16>
    %cst_75 = arith.constant dense<0.000000e+00> : vector<8x128xf32>
    %375 = tpu.matmul %374, %1, %cst_75 {dimension_numbers = #tpu.dot_dimension_numbers<[1], [0], [0], [1], [0, 0, 1, 1], [], []>} : vector<8x64xbf16>, vector<64x128xbf16>, vector<8x128xf32> -> vector<8x128xf32>
    %376 = vector.broadcast %2 : vector<1x128xf32> to vector<8x128xf32>
    %377 = arith.addf %375, %376 : vector<8x128xf32>
    %378 = arith.negf %377 : vector<8x128xf32>
    %379 = math.exp %378 : vector<8x128xf32>
    %cst_76 = arith.constant 1.000000e+00 : f32
    %380 = vector.broadcast %cst_76 : f32 to vector<8x128xf32>
    %381 = arith.addf %380, %379 : vector<8x128xf32>
    %382 = arith.divf %380, %381 : vector<8x128xf32>
    %383 = vector.extract_strided_slice %382 {offsets = [0, 0], sizes = [8, 32], strides = [1, 1]} : vector<8x128xf32> to vector<8x32xf32>
    %384 = vector.extract_strided_slice %382 {offsets = [0, 32], sizes = [8, 32], strides = [1, 1]} : vector<8x128xf32> to vector<8x32xf32>
    %385 = vector.extract_strided_slice %382 {offsets = [0, 64], sizes = [8, 32], strides = [1, 1]} : vector<8x128xf32> to vector<8x32xf32>
    %cst_77 = arith.constant 2.000000e+00 : f32
    %386 = vector.broadcast %cst_77 : f32 to vector<8x32xf32>
    %387 = arith.mulf %386, %385 : vector<8x32xf32>
    %cst_78 = arith.constant 1.000000e+00 : f32
    %388 = vector.broadcast %cst_78 : f32 to vector<8x32xf32>
    %389 = arith.subf %387, %388 : vector<8x32xf32>
    %390 = vector.extract_strided_slice %382 {offsets = [0, 96], sizes = [8, 32], strides = [1, 1]} : vector<8x128xf32> to vector<8x32xf32>
    %391 = arith.mulf %384, %345 : vector<8x32xf32>
    %392 = arith.mulf %383, %389 : vector<8x32xf32>
    %393 = arith.addf %391, %392 : vector<8x32xf32>
    %394 = math.tanh %393 : vector<8x32xf32>
    %395 = arith.mulf %390, %394 : vector<8x32xf32>
    %c8_i32 = arith.constant 8 : i32
    %396 = vector.broadcast %c8_i32 : i32 to vector<8x32xi32>
    %397 = arith.cmpi eq, %13, %396 : vector<8x32xi32>
    %398 = arith.select %397, %395, %350 : vector<8x32xi1>, vector<8x32xf32>
    %cst_79 = arith.constant 5.000000e-01 : f32
    %399 = vector.broadcast %cst_79 : f32 to vector<8x32xf32>
    %400 = arith.mulf %399, %398 : vector<8x32xf32>
    %cst_80 = arith.constant 0.707106769 : f32
    %401 = vector.broadcast %cst_80 : f32 to vector<8x32xf32>
    %402 = arith.mulf %398, %401 : vector<8x32xf32>
    %403 = math.erf %402 : vector<8x32xf32>
    %cst_81 = arith.constant 1.000000e+00 : f32
    %404 = vector.broadcast %cst_81 : f32 to vector<8x32xf32>
    %405 = arith.addf %404, %403 : vector<8x32xf32>
    %406 = arith.mulf %400, %405 : vector<8x32xf32>
    %407 = arith.truncf %406 : vector<8x32xf32> to vector<8x32xbf16>
    %c0_82 = arith.constant 0 : index
    %c0_83 = arith.constant 0 : index
    %408 = vector.load %arg7[%c0_82, %c0_83] : memref<32x64xbf16, #tpu.memory_space<vmem>>, vector<32x64xbf16>
    %cst_84 = arith.constant dense<0.000000e+00> : vector<8x64xf32>
    %409 = tpu.matmul %407, %408, %cst_84 {dimension_numbers = #tpu.dot_dimension_numbers<[1], [0], [0], [1], [0, 0, 1, 1], [], []>} : vector<8x32xbf16>, vector<32x64xbf16>, vector<8x64xf32> -> vector<8x64xf32>
    %c0_85 = arith.constant 0 : index
    %c0_86 = arith.constant 0 : index
    %410 = vector.load %arg8[%c0_85, %c0_86] : memref<1x64xf32, #tpu.memory_space<vmem>>, vector<1x64xf32>
    %411 = vector.broadcast %410 : vector<1x64xf32> to vector<8x64xf32>
    %412 = arith.addf %409, %411 : vector<8x64xf32>
    %cst_87 = arith.constant dense<0xFF800000> : vector<8xf32>
    %413 = vector.multi_reduction <maximumf>, %412, %cst_87 [1] : vector<8x64xf32> to vector<8xf32>
    %414 = vector.shape_cast %413 : vector<8xf32> to vector<8x1xf32>
    %415 = vector.broadcast %414 : vector<8x1xf32> to vector<8x64xf32>
    %416 = arith.subf %412, %415 : vector<8x64xf32>
    %417 = math.exp %416 : vector<8x64xf32>
    %cst_88 = arith.constant dense<0.000000e+00> : vector<8xf32>
    %418 = vector.multi_reduction <add>, %417, %cst_88 [1] : vector<8x64xf32> to vector<8xf32>
    %419 = vector.shape_cast %418 : vector<8xf32> to vector<8x1xf32>
    %420 = math.log %419 : vector<8x1xf32>
    %421 = vector.broadcast %420 : vector<8x1xf32> to vector<8x64xf32>
    %422 = arith.subf %416, %421 : vector<8x64xf32>
    %c0_89 = arith.constant 0 : index
    %c0_90 = arith.constant 0 : index
    %423 = vector.load %arg9[%c0_89, %c0_90] : memref<8x64xf32, #tpu.memory_space<vmem>>, vector<8x64xf32>
    tpu.vector_store %arg9[%c0_89, %c0_90], %422 {strides = array<i32>} : memref<8x64xf32, #tpu.memory_space<vmem>>, vector<8x64xf32>,
    return
  }
}

</mosaic_0001>

<llo_original>
// kernel: _forward_core.1
$region0: #{_forward_core.1}
  #allocation0 [shape = 'u32[]', space=smem, size = 0x4, offset = 0x4, fixed_abs, tag = 'smem constant byte address 0x4 - core index']
  #allocation1 [shape = 'u32[144,128]{1,0:T(1,128)}', space=vmem, size = 0x12000, scoped, tag = 'internal scratch']
  %s0 = inlined_call_operand.vmem [shape: f32[8,8,32], index: 0, kind: input, shape index: {}]
  %s1 = inlined_call_operand.vmem [shape: s32[8,1], index: 1, kind: input, shape index: {}]
  %s2 = inlined_call_operand.vmem [shape: bf16[32,128], index: 2, kind: input, shape index: {}]
  %s3 = inlined_call_operand.vmem [shape: bf16[32,128], index: 3, kind: input, shape index: {}]
  %s4 = inlined_call_operand.vmem [shape: f32[1,128], index: 4, kind: input, shape index: {}]
  %s5 = inlined_call_operand.vmem [shape: bf16[64,128], index: 5, kind: input, shape index: {}]
  %s6 = inlined_call_operand.vmem [shape: f32[1,128], index: 6, kind: input, shape index: {}]
  %s7 = inlined_call_operand.vmem [shape: bf16[32,64], index: 7, kind: input, shape index: {}]
  %s8 = inlined_call_operand.vmem [shape: f32[1,64], index: 8, kind: input, shape index: {}]
  %s9 = inlined_call_operand.hbm [shape: f32[8,64], index: 9, kind: output, shape index: {}]
  %s10 = sld [smem:[#allocation0]]
  $region46: #{_forward_core.1} parent=0
    _
  %s12 = ssub.s32 1, %s10
  %s13 = scalar_select 0, %s12, %s10
  $region1: #{_forward_core.1} parent=0
    #allocation2 [shape = 'u8[4096]{0}', space=vmem, size = 0x1000, scoped, tag = 'output window, operand 0, single buffered']
    #allocation3 [shape = 's32[1]{0}', space=sflag, size = 0x4, scoped, tag = 'scoped memory for _forward_core.1']
    %14 = vsyncpa [#allocation3], 0
    // Predicated region
    $region2: #{_forward_core.1} parent=1 // pred_check
      _
    $region3: #{_forward_core.1} parent=1 // pred_check_branch
      %16 = sbr.rel (0) target = $region5
    $region4: #{_forward_core.1} parent=1 // pred_region
      _
    $region5: #{_forward_core.1} parent=1 // pred_fallthru
      _
    // Predicated region
    $region6: #{_forward_core.1} parent=1 // pred_check
      _
    $region7: #{_forward_core.1} parent=1 // pred_check_branch
      %18 = sbr.rel (0) target = $region9
    $region8: #{_forward_core.1} parent=1 // pred_region
      _
    $region9: #{_forward_core.1} parent=1 // pred_fallthru
      _
    // Predicated region
    $region10: #{_forward_core.1} parent=1 // pred_check
      _
    $region11: #{_forward_core.1} parent=1 // pred_check_branch
      %20 = sbr.rel (0) target = $region13
    $region12: #{_forward_core.1} parent=1 // pred_region
      _
    $region13: #{_forward_core.1} parent=1 // pred_fallthru
      _
    // Predicated region
    $region14: #{_forward_core.1} parent=1 // pred_check
      _
    $region15: #{_forward_core.1} parent=1 // pred_check_branch
      %22 = sbr.rel (0) target = $region17
    $region16: #{_forward_core.1} parent=1 // pred_region
      _
    $region17: #{_forward_core.1} parent=1 // pred_fallthru
      _
    // Predicated region
    $region18: #{_forward_core.1} parent=1 // pred_check
      _
    $region19: #{_forward_core.1} parent=1 // pred_check_branch
      %24 = sbr.rel (0) target = $region21
    $region20: #{_forward_core.1} parent=1 // pred_region
      _
    $region21: #{_forward_core.1} parent=1 // pred_fallthru
      _
    // Predicated region
    $region22: #{_forward_core.1} parent=1 // pred_check
      _
    $region23: #{_forward_core.1} parent=1 // pred_check_branch
      %26 = sbr.rel (0) target = $region25
    $region24: #{_forward_core.1} parent=1 // pred_region
      _
    $region25: #{_forward_core.1} parent=1 // pred_fallthru
      _
    // Predicated region
    $region26: #{_forward_core.1} parent=1 // pred_check
      _
    $region27: #{_forward_core.1} parent=1 // pred_check_branch
      %28 = sbr.rel (0) target = $region29
    $region28: #{_forward_core.1} parent=1 // pred_region
      _
    $region29: #{_forward_core.1} parent=1 // pred_fallthru
      _
    // Predicated region
    $region30: #{_forward_core.1} parent=1 // pred_check
      _
    $region31: #{_forward_core.1} parent=1 // pred_check_branch
      %30 = sbr.rel (0) target = $region33
    $region32: #{_forward_core.1} parent=1 // pred_region
      _
    $region33: #{_forward_core.1} parent=1 // pred_fallthru
      _
    // Predicated region
    $region34: #{_forward_core.1} parent=1 // pred_check
      _
    $region35: #{_forward_core.1} parent=1 // pred_check_branch
      %32 = sbr.rel (0) target = $region37
    $region36: #{_forward_core.1} parent=1 // pred_region
      _
    $region37: #{_forward_core.1} parent=1 // pred_fallthru
      _
    %v34 = vld [vmem:[%s3] sm:$0xf]
    %v35 = vld [vmem:[%s3 + $0x4] sm:$0xf]
    %v36 = vld [vmem:[%s3 + $0x8] sm:$0xf]
    %v37 = vld [vmem:[%s3 + $0xc] sm:$0xf]
    %v38 = vld [vmem:[%s5] sm:$0xf]
    %v39 = vld [vmem:[%s5 + $0x4] sm:$0xf]
    %v40 = vld [vmem:[%s5 + $0x8] sm:$0xf]
    %v41 = vld [vmem:[%s5 + $0xc] sm:$0xf]
    %v42 = vld [vmem:[%s5 + $0x10] sm:$0xf]
    %v43 = vld [vmem:[%s5 + $0x14] sm:$0xf]
    %v44 = vld [vmem:[%s5 + $0x18] sm:$0xf]
    %v45 = vld [vmem:[%s5 + $0x1c] sm:$0xf]
    %v46 = vld [vmem:[%s6] sm:$0x1]
    %v47 = vld [vmem:[%s0] sm:$0xff]
    %v48 = vld [vmem:[%s0 + $0x8] sm:$0xff]
    %v49 = vld [vmem:[%s0 + $0x10] sm:$0xff]
    %v50 = vld [vmem:[%s0 + $0x18] sm:$0xff]
    %v51 = vld [vmem:[%s0 + $0x20] sm:$0xff]
    %v52 = vld [vmem:[%s0 + $0x28] sm:$0xff]
    %v53 = vld [vmem:[%s0 + $0x30] sm:$0xff]
    %v54 = vld [vmem:[%s0 + $0x38] sm:$0xff]
    %v55 = vpack.c.bf16 %v48, %v47
    %v56 = vpack.c.bf16 %v50, %v49
    %v57 = vpack.c.bf16 %v52, %v51
    %v58 = vpack.c.bf16 %v54, %v53
    %v59 = vld [vmem:[%s2] sm:$0xf]
    %v60 = vld [vmem:[%s2 + $0x4] sm:$0xf]
    %v61 = vld [vmem:[%s2 + $0x8] sm:$0xf]
    %v62 = vld [vmem:[%s2 + $0xc] sm:$0xf]
    %v63 = vld [vmem:[%s4] sm:$0x1]
    %v65 = vlaneseq
    %v66 = vshrl.u32 %v65, 7
    %v67 = vsub.s32 0, %v66
    %v68 = vrot.slane %v63, %v67
    %v74 = vunpack.c.l.b16 %v59
    %v75 = vunpack.c.l.b16 %v60
    %v76 = vunpack.c.l.b16 %v61
    %v77 = vunpack.c.l.b16 %v62
    %v78 = vpack.c.b16 %v75, %v74
    %v79 = vpack.c.b16 %v77, %v76
    %vm82 = vcmask 261120
    %v84 = vsel %vm82, %v55, 0
    %v87 = vsel %vm82, %v56, 0
    %v90 = vsel %vm82, %v57, 0
    %v93 = vsel %vm82, %v58, 0
    %95 = vmatprep.subr.bf16.mxu0 0
    %96 = vmatpush1.bf16.msra.mxu0 0
    %97 = vmatprep.subr.bf16.mxu0 0
    %98 = vmatpush1.bf16.msra.mxu0 0
    %99 = vmatprep.subr.bf16.mxu0 0
    %100 = vmatpush1.bf16.msra.mxu0 0
    %101 = vmatprep.subr.bf16.mxu0 0
    %102 = vmatpush1.bf16.msra.mxu0 0
    %103 = vmatprep.subr.bf16.mxu0 0
    %104 = vmatpush1.bf16.msra.mxu0 0
    %105 = vmatprep.subr.bf16.mxu0 0
    %106 = vmatpush1.bf16.msra.mxu0 0
    %107 = vmatprep.subr.bf16.mxu0 0
    %108 = vmatpush1.bf16.msra.mxu0 %v79
    %109 = vmatprep.subr.bf16.mxu0 0
    %110 = vmatpush1.bf16.msra.mxu0 %v78
    %111 = vmatprep.subr.bf16.mxu0 0
    %112 = vmatpush2.bf16.msra.mxu0 0
    %113 = vmatprep.subr.bf16.mxu0 0
    %114 = vmatpush2.bf16.msra.mxu0 0
    %115 = vmatprep.subr.bf16.mxu0 0
    %116 = vmatpush2.bf16.msra.mxu0 0
    %117 = vmatprep.subr.bf16.mxu0 0
    %118 = vmatpush2.bf16.msra.mxu0 0
    %119 = vmatprep.subr.bf16.mxu0 0
    %120 = vmatpush2.bf16.msra.mxu0 0
    %121 = vmatprep.subr.bf16.mxu0 0
    %122 = vmatpush2.bf16.msra.mxu0 0
    %123 = vmatprep.subr.bf16.mxu0 0
    %124 = vmatpush2.bf16.msra.mxu0 0
    %125 = vmatprep.subr.bf16.mxu0 0
    %126 = vmatpush2.bf16.msra.mxu0 0
    %127 = vmatprep.mubr.bf16.mxu0 0
    %128 = vmatmul.mubr.bf16.gmra.mxu0 %v84
    %v129 = vpop.f32.mrf.mxu0
    %v130 = vadd.f32 %v68, %v129
    %v131 = vpop.f32.mrf.mxu0
    %v132 = vpop.f32.mrf.mxu0
    %v133 = vadd.f32 %v68, %v132
    %v134 = vpop.f32.mrf.mxu0
    %135 = vmatprep.mubr.bf16.mxu0 0
    %136 = vmatmul.mubr.bf16.gmra.mxu0 %v87
    %v137 = vpop.f32.mrf.mxu0
    %v138 = vadd.f32 %v68, %v137
    %v139 = vpop.f32.mrf.mxu0
    %v140 = vpop.f32.mrf.mxu0
    %v141 = vadd.f32 %v68, %v140
    %v142 = vpop.f32.mrf.mxu0
    %143 = vmatprep.mubr.bf16.mxu0 0
    %144 = vmatmul.mubr.bf16.gmra.mxu0 %v90
    %v145 = vpop.f32.mrf.mxu0
    %v146 = vadd.f32 %v68, %v145
    %v147 = vpop.f32.mrf.mxu0
    %v148 = vpop.f32.mrf.mxu0
    %v149 = vadd.f32 %v68, %v148
    %v150 = vpop.f32.mrf.mxu0
    %151 = vmatprep.mubr.bf16.mxu0 0
    %152 = vmatmul.mubr.bf16.gmra.mxu0 %v93
    %v153 = vpop.f32.mrf.mxu0
    %v154 = vadd.f32 %v68, %v153
    %v155 = vpop.f32.mrf.mxu0
    %v156 = vpop.f32.mrf.mxu0
    %v157 = vadd.f32 %v68, %v156
    %v158 = vpop.f32.mrf.mxu0
    %159 = vdwg.mxu0
    %v160 = vld [vmem:[%s1] sm:$0xff]
    %161 = vset.pattern.permute.xlu0 0
    %162 = vperm.xlu0 %161, %v160
    %v163 = vpop.permute.xlu0 %162
    %v168 = vunpack.c.l.b16 %v34
    %v169 = vunpack.c.l.b16 %v35
    %v170 = vunpack.c.l.b16 %v36
    %v171 = vunpack.c.l.b16 %v37
    %v172 = vpack.c.b16 %v169, %v168
    %v173 = vpack.c.b16 %v171, %v170
    %v177 = vsel %vm82, 0, 0
    %179 = vmatprep.subr.bf16.mxu0 0
    %180 = vmatpush1.bf16.msra.mxu0 0
    %181 = vmatprep.subr.bf16.mxu0 0
    %182 = vmatpush1.bf16.msra.mxu0 0
    %183 = vmatprep.subr.bf16.mxu0 0
    %184 = vmatpush1.bf16.msra.mxu0 0
    %185 = vmatprep.subr.bf16.mxu0 0
    %186 = vmatpush1.bf16.msra.mxu0 0
    %187 = vmatprep.subr.bf16.mxu0 0
    %188 = vmatpush1.bf16.msra.mxu0 0
    %189 = vmatprep.subr.bf16.mxu0 0
    %190 = vmatpush1.bf16.msra.mxu0 0
    %191 = vmatprep.subr.bf16.mxu0 0
    %192 = vmatpush1.bf16.msra.mxu0 %v173
    %193 = vmatprep.subr.bf16.mxu0 0
    %194 = vmatpush1.bf16.msra.mxu0 %v172
    %195 = vmatprep.subr.bf16.mxu0 0
    %196 = vmatpush2.bf16.msra.mxu0 0
    %197 = vmatprep.subr.bf16.mxu0 0
    %198 = vmatpush2.bf16.msra.mxu0 0
    %199 = vmatprep.subr.bf16.mxu0 0
    %200 = vmatpush2.bf16.msra.mxu0 0
    %201 = vmatprep.subr.bf16.mxu0 0
    %202 = vmatpush2.bf16.msra.mxu0 0
    %203 = vmatprep.subr.bf16.mxu0 0
    %204 = vmatpush2.bf16.msra.mxu0 0
    %205 = vmatprep.subr.bf16.mxu0 0
    %206 = vmatpush2.bf16.msra.mxu0 0
    %207 = vmatprep.subr.bf16.mxu0 0
    %208 = vmatpush2.bf16.msra.mxu0 0
    %209 = vmatprep.subr.bf16.mxu0 0
    %210 = vmatpush2.bf16.msra.mxu0 0
    %211 = vmatprep.mubr.bf16.mxu0 0
    %212 = vmatmul.mubr.bf16.gmra.mxu0 %v177
    %v213 = vpop.f32.mrf.mxu0
    %v214 = vadd.f32 0.0, %v213
    %v215 = vpop.f32.mrf.mxu0
    %v216 = vpop.f32.mrf.mxu0
    %v217 = vpop.f32.mrf.mxu0
    %218 = vdwg.mxu0
    %v219 = vadd.f32 %v130, %v214
    %v220 = vxor.u32 %v219, 2147483648
    %v221 = vmul.f32 %v220, 1.442695
    %v222 = vpow.pop %v221
    %v223 = vadd.f32 %v222, 1.0
    %v224 = vrcp.pop %v223
    %v225 = vmul.f32 1.0, %v224
    %v226 = vmul.f32 %v225, 2.0
    %v227 = vsub.f32 %v226, 1.0
    %v228 = vmul.f32 %v225, 0.0
    %230 = vrot.lane.b32.xlu0 %v227, 64
    %v231 = vpop.permute.xlu0 %230
    %v233 = vmul.f32 %v225, %v231
    %235 = vrot.lane.b32.xlu0 %v233, 32
    %v236 = vpop.permute.xlu0 %235
    %v238 = vadd.f32 %v228, %v236
    %v239 = vtanh.pop %v238
    %241 = vrot.lane.b32.xlu0 %v239, 64
    %v242 = vpop.permute.xlu0 %241
    %v244 = vmul.f32 %v225, %v242
    %246 = vrot.lane.b32.xlu0 %v244, 32
    %v247 = vpop.permute.xlu0 %246
    %v249 = vsel %vm82, %v247, 0.0
    %v250 = vpack.c.bf16 %v249, %v249
    %v252 = vlaneseq
    %v253 = vshrl.u32 %v252, 7
    %v254 = vsub.s32 0, %v253
    %v255 = vrot.slane %v46, %v254
    %v265 = vunpack.c.l.b16 %v38
    %v266 = vunpack.c.l.b16 %v39
    %v267 = vunpack.c.l.b16 %v40
    %v268 = vunpack.c.l.b16 %v41
    %v269 = vunpack.c.l.b16 %v42
    %v270 = vunpack.c.l.b16 %v43
    %v271 = vunpack.c.l.b16 %v44
    %v272 = vunpack.c.l.b16 %v45
    %v273 = vpack.c.b16 %v266, %v265
    %v274 = vpack.c.b16 %v268, %v267
    %v275 = vpack.c.b16 %v270, %v269
    %v276 = vpack.c.b16 %v272, %v271
    %vm281 = vcmask 523264
    %v283 = vsel %vm281, %v250, 0
    %285 = vmatprep.subr.bf16.mxu0 0
    %286 = vmatpush1.bf16.msra.mxu0 0
    %287 = vmatprep.subr.bf16.mxu0 0
    %288 = vmatpush1.bf16.msra.mxu0 0
    %289 = vmatprep.subr.bf16.mxu0 0
    %290 = vmatpush1.bf16.msra.mxu0 0
    %291 = vmatprep.subr.bf16.mxu0 0
    %292 = vmatpush1.bf16.msra.mxu0 0
    %293 = vmatprep.subr.bf16.mxu0 0
    %294 = vmatpush1.bf16.msra.mxu0 %v276
    %295 = vmatprep.subr.bf16.mxu0 0
    %296 = vmatpush1.bf16.msra.mxu0 %v275
    %297 = vmatprep.subr.bf16.mxu0 0
    %298 = vmatpush1.bf16.msra.mxu0 %v274
    %299 = vmatprep.subr.bf16.mxu0 0
    %300 = vmatpush1.bf16.msra.mxu0 %v273
    %301 = vmatprep.subr.bf16.mxu0 0
    %302 = vmatpush2.bf16.msra.mxu0 0
    %303 = vmatprep.subr.bf16.mxu0 0
    %304 = vmatpush2.bf16.msra.mxu0 0
    %305 = vmatprep.subr.bf16.mxu0 0
    %306 = vmatpush2.bf16.msra.mxu0 0
    %307 = vmatprep.subr.bf16.mxu0 0
    %308 = vmatpush2.bf16.msra.mxu0 0
    %309 = vmatprep.subr.bf16.mxu0 0
    %310 = vmatpush2.bf16.msra.mxu0 0
    %311 = vmatprep.subr.bf16.mxu0 0
    %312 = vmatpush2.bf16.msra.mxu0 0
    %313 = vmatprep.subr.bf16.mxu0 0
    %314 = vmatpush2.bf16.msra.mxu0 0
    %315 = vmatprep.subr.bf16.mxu0 0
    %316 = vmatpush2.bf16.msra.mxu0 0
    %317 = vmatprep.mubr.bf16.mxu0 0
    %318 = vmatmul.mubr.bf16.gmra.mxu0 %v283
    %v319 = vpop.f32.mrf.mxu0
    %v320 = vadd.f32 %v255, %v319
    %v321 = vpop.f32.mrf.mxu0
    %v322 = vpop.f32.mrf.mxu0
    %v323 = vpop.f32.mrf.mxu0
    %324 = vdwg.mxu0
    %v325 = vxor.u32 %v320, 2147483648
    %v326 = vmul.f32 %v325, 1.442695
    %v327 = vpow.pop %v326
    %v328 = vadd.f32 %v327, 1.0
    %v329 = vrcp.pop %v328
    %v330 = vmul.f32 1.0, %v329
    %v331 = vmul.f32 %v330, 2.0
    %v332 = vsub.f32 %v331, 1.0
    %v333 = vmul.f32 %v330, 0.0
    %335 = vrot.lane.b32.xlu0 %v332, 64
    %v336 = vpop.permute.xlu0 %335
    %v338 = vmul.f32 %v330, %v336
    %340 = vrot.lane.b32.xlu0 %v338, 32
    %v341 = vpop.permute.xlu0 %340
    %v343 = vadd.f32 %v333, %v341
    %v344 = vtanh.pop %v343
    %346 = vrot.lane.b32.xlu0 %v344, 64
    %v347 = vpop.permute.xlu0 %346
    %v349 = vmul.f32 %v330, %v347
    %vm350 = vcmp.eq.s32.totalorder %v163, 1
    %v351 = vsel %vm350, %v349, 0.0
    %v352 = vpack.c.bf16 %v244, %v244
    %354 = vrot.lane.b32.xlu0 %v352, 32
    %v355 = vpop.permute.xlu0 %354
    %v357 = vsel %vm82, %v355, 0
    %359 = vmatprep.subr.bf16.mxu0 0
    %360 = vmatpush1.bf16.msra.mxu0 0
    %361 = vmatprep.subr.bf16.mxu0 0
    %362 = vmatpush1.bf16.msra.mxu0 0
    %363 = vmatprep.subr.bf16.mxu0 0
    %364 = vmatpush1.bf16.msra.mxu0 0
    %365 = vmatprep.subr.bf16.mxu0 0
    %366 = vmatpush1.bf16.msra.mxu0 0
    %367 = vmatprep.subr.bf16.mxu0 0
    %368 = vmatpush1.bf16.msra.mxu0 0
    %369 = vmatprep.subr.bf16.mxu0 0
    %370 = vmatpush1.bf16.msra.mxu0 0
    %371 = vmatprep.subr.bf16.mxu0 0
    %372 = vmatpush1.bf16.msra.mxu0 %v173
    %373 = vmatprep.subr.bf16.mxu0 0
    %374 = vmatpush1.bf16.msra.mxu0 %v172
    %375 = vmatprep.subr.bf16.mxu0 0
    %376 = vmatpush2.bf16.msra.mxu0 0
    %377 = vmatprep.subr.bf16.mxu0 0
    %378 = vmatpush2.bf16.msra.mxu0 0
    %379 = vmatprep.subr.bf16.mxu0 0
    %380 = vmatpush2.bf16.msra.mxu0 0
    %381 = vmatprep.subr.bf16.mxu0 0
    %382 = vmatpush2.bf16.msra.mxu0 0
    %383 = vmatprep.subr.bf16.mxu0 0
    %384 = vmatpush2.bf16.msra.mxu0 0
    %385 = vmatprep.subr.bf16.mxu0 0
    %386 = vmatpush2.bf16.msra.mxu0 0
    %387 = vmatprep.subr.bf16.mxu0 0
    %388 = vmatpush2.bf16.msra.mxu0 0
    %389 = vmatprep.subr.bf16.mxu0 0
    %390 = vmatpush2.bf16.msra.mxu0 0
    %391 = vmatprep.mubr.bf16.mxu0 0
    %392 = vmatmul.mubr.bf16.gmra.mxu0 %v357
    %v393 = vpop.f32.mrf.mxu0
    %v394 = vadd.f32 0.0, %v393
    %v395 = vpop.f32.mrf.mxu0
    %v396 = vpop.f32.mrf.mxu0
    %v397 = vpop.f32.mrf.mxu0
    %398 = vdwg.mxu0
    %v399 = vadd.f32 %v133, %v394
    %v400 = vxor.u32 %v399, 2147483648
    %v401 = vmul.f32 %v400, 1.442695
    %v402 = vpow.pop %v401
    %v403 = vadd.f32 %v402, 1.0
    %v404 = vrcp.pop %v403
    %v405 = vmul.f32 1.0, %v404
    %v406 = vmul.f32 %v405, 2.0
    %v407 = vsub.f32 %v406, 1.0
    %v408 = vmul.f32 %v405, %v238
    %410 = vrot.lane.b32.xlu0 %v407, 64
    %v411 = vpop.permute.xlu0 %410
    %v413 = vmul.f32 %v405, %v411
    %415 = vrot.lane.b32.xlu0 %v413, 32
    %v416 = vpop.permute.xlu0 %415
    %v418 = vadd.f32 %v408, %v416
    %v419 = vtanh.pop %v418
    %421 = vrot.lane.b32.xlu0 %v419, 64
    %v422 = vpop.permute.xlu0 %421
    %v424 = vmul.f32 %v405, %v422
    %426 = vrot.lane.b32.xlu0 %v424, 32
    %v427 = vpop.permute.xlu0 %426
    %430 = vrot.lane.b32.xlu0 %v349, 64
    %v431 = vpop.permute.xlu0 %430
    %v433 = vsel %vm82, %v427, %v431
    %v434 = vpack.c.bf16 %v433, %v433
    %v436 = vsel %vm281, %v434, 0
    %438 = vmatprep.subr.bf16.mxu0 0
    %439 = vmatpush1.bf16.msra.mxu0 0
    %440 = vmatprep.subr.bf16.mxu0 0
    %441 = vmatpush1.bf16.msra.mxu0 0
    %442 = vmatprep.subr.bf16.mxu0 0
    %443 = vmatpush1.bf16.msra.mxu0 0
    %444 = vmatprep.subr.bf16.mxu0 0
    %445 = vmatpush1.bf16.msra.mxu0 0
    %446 = vmatprep.subr.bf16.mxu0 0
    %447 = vmatpush1.bf16.msra.mxu0 %v276
    %448 = vmatprep.subr.bf16.mxu0 0
    %449 = vmatpush1.bf16.msra.mxu0 %v275
    %450 = vmatprep.subr.bf16.mxu0 0
    %451 = vmatpush1.bf16.msra.mxu0 %v274
    %452 = vmatprep.subr.bf16.mxu0 0
    %453 = vmatpush1.bf16.msra.mxu0 %v273
    %454 = vmatprep.subr.bf16.mxu0 0
    %455 = vmatpush2.bf16.msra.mxu0 0
    %456 = vmatprep.subr.bf16.mxu0 0
    %457 = vmatpush2.bf16.msra.mxu0 0
    %458 = vmatprep.subr.bf16.mxu0 0
    %459 = vmatpush2.bf16.msra.mxu0 0
    %460 = vmatprep.subr.bf16.mxu0 0
    %461 = vmatpush2.bf16.msra.mxu0 0
    %462 = vmatprep.subr.bf16.mxu0 0
    %463 = vmatpush2.bf16.msra.mxu0 0
    %464 = vmatprep.subr.bf16.mxu0 0
    %465 = vmatpush2.bf16.msra.mxu0 0
    %466 = vmatprep.subr.bf16.mxu0 0
    %467 = vmatpush2.bf16.msra.mxu0 0
    %468 = vmatprep.subr.bf16.mxu0 0
    %469 = vmatpush2.bf16.msra.mxu0 0
    %470 = vmatprep.mubr.bf16.mxu0 0
    %471 = vmatmul.mubr.bf16.gmra.mxu0 %v436
    %v472 = vpop.f32.mrf.mxu0
    %v473 = vadd.f32 %v255, %v472
    %v474 = vpop.f32.mrf.mxu0
    %v475 = vpop.f32.mrf.mxu0
    %v476 = vpop.f32.mrf.mxu0
    %477 = vdwg.mxu0
    %v478 = vxor.u32 %v473, 2147483648
    %v479 = vmul.f32 %v478, 1.442695
    %v480 = vpow.pop %v479
    %v481 = vadd.f32 %v480, 1.0
    %v482 = vrcp.pop %v481
    %v483 = vmul.f32 1.0, %v482
    %v484 = vmul.f32 %v483, 2.0
    %v485 = vsub.f32 %v484, 1.0
    %v486 = vmul.f32 %v483, %v343
    %488 = vrot.lane.b32.xlu0 %v485, 64
    %v489 = vpop.permute.xlu0 %488
    %v491 = vmul.f32 %v483, %v489
    %493 = vrot.lane.b32.xlu0 %v491, 32
    %v494 = vpop.permute.xlu0 %493
    %v496 = vadd.f32 %v486, %v494
    %v497 = vtanh.pop %v496
    %499 = vrot.lane.b32.xlu0 %v497, 64
    %v500 = vpop.permute.xlu0 %499
    %v502 = vmul.f32 %v483, %v500
    %vm503 = vcmp.eq.s32.totalorder %v163, 2
    %v504 = vsel %vm503, %v502, %v351
    %v505 = vpack.c.bf16 %v424, %v424
    %507 = vrot.lane.b32.xlu0 %v505, 32
    %v508 = vpop.permute.xlu0 %507
    %v510 = vsel %vm82, %v508, 0
    %512 = vmatprep.subr.bf16.mxu0 0
    %513 = vmatpush1.bf16.msra.mxu0 0
    %514 = vmatprep.subr.bf16.mxu0 0
    %515 = vmatpush1.bf16.msra.mxu0 0
    %516 = vmatprep.subr.bf16.mxu0 0
    %517 = vmatpush1.bf16.msra.mxu0 0
    %518 = vmatprep.subr.bf16.mxu0 0
    %519 = vmatpush1.bf16.msra.mxu0 0
    %520 = vmatprep.subr.bf16.mxu0 0
    %521 = vmatpush1.bf16.msra.mxu0 0
    %522 = vmatprep.subr.bf16.mxu0 0
    %523 = vmatpush1.bf16.msra.mxu0 0
    %524 = vmatprep.subr.bf16.mxu0 0
    %525 = vmatpush1.bf16.msra.mxu0 %v173
    %526 = vmatprep.subr.bf16.mxu0 0
    %527 = vmatpush1.bf16.msra.mxu0 %v172
    %528 = vmatprep.subr.bf16.mxu0 0
    %529 = vmatpush2.bf16.msra.mxu0 0
    %530 = vmatprep.subr.bf16.mxu0 0
    %531 = vmatpush2.bf16.msra.mxu0 0
    %532 = vmatprep.subr.bf16.mxu0 0
    %533 = vmatpush2.bf16.msra.mxu0 0
    %534 = vmatprep.subr.bf16.mxu0 0
    %535 = vmatpush2.bf16.msra.mxu0 0
    %536 = vmatprep.subr.bf16.mxu0 0
    %537 = vmatpush2.bf16.msra.mxu0 0
    %538 = vmatprep.subr.bf16.mxu0 0
    %539 = vmatpush2.bf16.msra.mxu0 0
    %540 = vmatprep.subr.bf16.mxu0 0
    %541 = vmatpush2.bf16.msra.mxu0 0
    %542 = vmatprep.subr.bf16.mxu0 0
    %543 = vmatpush2.bf16.msra.mxu0 0
    %544 = vmatprep.mubr.bf16.mxu0 0
    %545 = vmatmul.mubr.bf16.gmra.mxu0 %v510
    %v546 = vpop.f32.mrf.mxu0
    %v547 = vadd.f32 0.0, %v546
    %v548 = vpop.f32.mrf.mxu0
    %v549 = vpop.f32.mrf.mxu0
    %v550 = vpop.f32.mrf.mxu0
    %551 = vdwg.mxu0
    %v552 = vadd.f32 %v138, %v547
    %v553 = vxor.u32 %v552, 2147483648
    %v554 = vmul.f32 %v553, 1.442695
    %v555 = vpow.pop %v554
    %v556 = vadd.f32 %v555, 1.0
    %v557 = vrcp.pop %v556
    %v558 = vmul.f32 1.0, %v557
    %v559 = vmul.f32 %v558, 2.0
    %v560 = vsub.f32 %v559, 1.0
    %v561 = vmul.f32 %v558, %v418
    %563 = vrot.lane.b32.xlu0 %v560, 64
    %v564 = vpop.permute.xlu0 %563
    %v566 = vmul.f32 %v558, %v564
    %568 = vrot.lane.b32.xlu0 %v566, 32
    %v569 = vpop.permute.xlu0 %568
    %v571 = vadd.f32 %v561, %v569
    %v572 = vtanh.pop %v571
    %574 = vrot.lane.b32.xlu0 %v572, 64
    %v575 = vpop.permute.xlu0 %574
    %v577 = vmul.f32 %v558, %v575
    %579 = vrot.lane.b32.xlu0 %v577, 32
    %v580 = vpop.permute.xlu0 %579
    %583 = vrot.lane.b32.xlu0 %v502, 64
    %v584 = vpop.permute.xlu0 %583
    %v586 = vsel %vm82, %v580, %v584
    %v587 = vpack.c.bf16 %v586, %v586
    %v589 = vsel %vm281, %v587, 0
    %591 = vmatprep.subr.bf16.mxu0 0
    %592 = vmatpush1.bf16.msra.mxu0 0
    %593 = vmatprep.subr.bf16.mxu0 0
    %594 = vmatpush1.bf16.msra.mxu0 0
    %595 = vmatprep.subr.bf16.mxu0 0
    %596 = vmatpush1.bf16.msra.mxu0 0
    %597 = vmatprep.subr.bf16.mxu0 0
    %598 = vmatpush1.bf16.msra.mxu0 0
    %599 = vmatprep.subr.bf16.mxu0 0
    %600 = vmatpush1.bf16.msra.mxu0 %v276
    %601 = vmatprep.subr.bf16.mxu0 0
    %602 = vmatpush1.bf16.msra.mxu0 %v275
    %603 = vmatprep.subr.bf16.mxu0 0
    %604 = vmatpush1.bf16.msra.mxu0 %v274
    %605 = vmatprep.subr.bf16.mxu0 0
    %606 = vmatpush1.bf16.msra.mxu0 %v273
    %607 = vmatprep.subr.bf16.mxu0 0
    %608 = vmatpush2.bf16.msra.mxu0 0
    %609 = vmatprep.subr.bf16.mxu0 0
    %610 = vmatpush2.bf16.msra.mxu0 0
    %611 = vmatprep.subr.bf16.mxu0 0
    %612 = vmatpush2.bf16.msra.mxu0 0
    %613 = vmatprep.subr.bf16.mxu0 0
    %614 = vmatpush2.bf16.msra.mxu0 0
    %615 = vmatprep.subr.bf16.mxu0 0
    %616 = vmatpush2.bf16.msra.mxu0 0
    %617 = vmatprep.subr.bf16.mxu0 0
    %618 = vmatpush2.bf16.msra.mxu0 0
    %619 = vmatprep.subr.bf16.mxu0 0
    %620 = vmatpush2.bf16.msra.mxu0 0
    %621 = vmatprep.subr.bf16.mxu0 0
    %622 = vmatpush2.bf16.msra.mxu0 0
    %623 = vmatprep.mubr.bf16.mxu0 0
    %624 = vmatmul.mubr.bf16.gmra.mxu0 %v589
    %v625 = vpop.f32.mrf.mxu0
    %v626 = vadd.f32 %v255, %v625
    %v627 = vpop.f32.mrf.mxu0
    %v628 = vpop.f32.mrf.mxu0
    %v629 = vpop.f32.mrf.mxu0
    %630 = vdwg.mxu0
    %v631 = vxor.u32 %v626, 2147483648
    %v632 = vmul.f32 %v631, 1.442695
    %v633 = vpow.pop %v632
    %v634 = vadd.f32 %v633, 1.0
    %v635 = vrcp.pop %v634
    %v636 = vmul.f32 1.0, %v635
    %v637 = vmul.f32 %v636, 2.0
    %v638 = vsub.f32 %v637, 1.0
    %v639 = vmul.f32 %v636, %v496
    %641 = vrot.lane.b32.xlu0 %v638, 64
    %v642 = vpop.permute.xlu0 %641
    %v644 = vmul.f32 %v636, %v642
    %646 = vrot.lane.b32.xlu0 %v644, 32
    %v647 = vpop.permute.xlu0 %646
    %v649 = vadd.f32 %v639, %v647
    %v650 = vtanh.pop %v649
    %652 = vrot.lane.b32.xlu0 %v650, 64
    %v653 = vpop.permute.xlu0 %652
    %v655 = vmul.f32 %v636, %v653
    %vm656 = vcmp.eq.s32.totalorder %v163, 3
    %v657 = vsel %vm656, %v655, %v504
    %v658 = vpack.c.bf16 %v577, %v577
    %660 = vrot.lane.b32.xlu0 %v658, 32
    %v661 = vpop.permute.xlu0 %660
    %v663 = vsel %vm82, %v661, 0
    %665 = vmatprep.subr.bf16.mxu0 0
    %666 = vmatpush1.bf16.msra.mxu0 0
    %667 = vmatprep.subr.bf16.mxu0 0
    %668 = vmatpush1.bf16.msra.mxu0 0
    %669 = vmatprep.subr.bf16.mxu0 0
    %670 = vmatpush1.bf16.msra.mxu0 0
    %671 = vmatprep.subr.bf16.mxu0 0
    %672 = vmatpush1.bf16.msra.mxu0 0
    %673 = vmatprep.subr.bf16.mxu0 0
    %674 = vmatpush1.bf16.msra.mxu0 0
    %675 = vmatprep.subr.bf16.mxu0 0
    %676 = vmatpush1.bf16.msra.mxu0 0
    %677 = vmatprep.subr.bf16.mxu0 0
    %678 = vmatpush1.bf16.msra.mxu0 %v173
    %679 = vmatprep.subr.bf16.mxu0 0
    %680 = vmatpush1.bf16.msra.mxu0 %v172
    %681 = vmatprep.subr.bf16.mxu0 0
    %682 = vmatpush2.bf16.msra.mxu0 0
    %683 = vmatprep.subr.bf16.mxu0 0
    %684 = vmatpush2.bf16.msra.mxu0 0
    %685 = vmatprep.subr.bf16.mxu0 0
    %686 = vmatpush2.bf16.msra.mxu0 0
    %687 = vmatprep.subr.bf16.mxu0 0
    %688 = vmatpush2.bf16.msra.mxu0 0
    %689 = vmatprep.subr.bf16.mxu0 0
    %690 = vmatpush2.bf16.msra.mxu0 0
    %691 = vmatprep.subr.bf16.mxu0 0
    %692 = vmatpush2.bf16.msra.mxu0 0
    %693 = vmatprep.subr.bf16.mxu0 0
    %694 = vmatpush2.bf16.msra.mxu0 0
    %695 = vmatprep.subr.bf16.mxu0 0
    %696 = vmatpush2.bf16.msra.mxu0 0
    %697 = vmatprep.mubr.bf16.mxu0 0
    %698 = vmatmul.mubr.bf16.gmra.mxu0 %v663
    %v699 = vpop.f32.mrf.mxu0
    %v700 = vadd.f32 0.0, %v699
    %v701 = vpop.f32.mrf.mxu0
    %v702 = vpop.f32.mrf.mxu0
    %v703 = vpop.f32.mrf.mxu0
    %704 = vdwg.mxu0
    %v705 = vadd.f32 %v141, %v700
    %v706 = vxor.u32 %v705, 2147483648
    %v707 = vmul.f32 %v706, 1.442695
    %v708 = vpow.pop %v707
    %v709 = vadd.f32 %v708, 1.0
    %v710 = vrcp.pop %v709
    %v711 = vmul.f32 1.0, %v710
    %v712 = vmul.f32 %v711, 2.0
    %v713 = vsub.f32 %v712, 1.0
    %v714 = vmul.f32 %v711, %v571
    %716 = vrot.lane.b32.xlu0 %v713, 64
    %v717 = vpop.permute.xlu0 %716
    %v719 = vmul.f32 %v711, %v717
    %721 = vrot.lane.b32.xlu0 %v719, 32
    %v722 = vpop.permute.xlu0 %721
    %v724 = vadd.f32 %v714, %v722
    %v725 = vtanh.pop %v724
    %727 = vrot.lane.b32.xlu0 %v725, 64
    %v728 = vpop.permute.xlu0 %727
    %v730 = vmul.f32 %v711, %v728
    %732 = vrot.lane.b32.xlu0 %v730, 32
    %v733 = vpop.permute.xlu0 %732
    %736 = vrot.lane.b32.xlu0 %v655, 64
    %v737 = vpop.permute.xlu0 %736
    %v739 = vsel %vm82, %v733, %v737
    %v740 = vpack.c.bf16 %v739, %v739
    %v742 = vsel %vm281, %v740, 0
    %744 = vmatprep.subr.bf16.mxu0 0
    %745 = vmatpush1.bf16.msra.mxu0 0
    %746 = vmatprep.subr.bf16.mxu0 0
    %747 = vmatpush1.bf16.msra.mxu0 0
    %748 = vmatprep.subr.bf16.mxu0 0
    %749 = vmatpush1.bf16.msra.mxu0 0
    %750 = vmatprep.subr.bf16.mxu0 0
    %751 = vmatpush1.bf16.msra.mxu0 0
    %752 = vmatprep.subr.bf16.mxu0 0
    %753 = vmatpush1.bf16.msra.mxu0 %v276
    %754 = vmatprep.subr.bf16.mxu0 0
    %755 = vmatpush1.bf16.msra.mxu0 %v275
    %756 = vmatprep.subr.bf16.mxu0 0
    %757 = vmatpush1.bf16.msra.mxu0 %v274
    %758 = vmatprep.subr.bf16.mxu0 0
    %759 = vmatpush1.bf16.msra.mxu0 %v273
    %760 = vmatprep.subr.bf16.mxu0 0
    %761 = vmatpush2.bf16.msra.mxu0 0
    %762 = vmatprep.subr.bf16.mxu0 0
    %763 = vmatpush2.bf16.msra.mxu0 0
    %764 = vmatprep.subr.bf16.mxu0 0
    %765 = vmatpush2.bf16.msra.mxu0 0
    %766 = vmatprep.subr.bf16.mxu0 0
    %767 = vmatpush2.bf16.msra.mxu0 0
    %768 = vmatprep.subr.bf16.mxu0 0
    %769 = vmatpush2.bf16.msra.mxu0 0
    %770 = vmatprep.subr.bf16.mxu0 0
    %771 = vmatpush2.bf16.msra.mxu0 0
    %772 = vmatprep.subr.bf16.mxu0 0
    %773 = vmatpush2.bf16.msra.mxu0 0
    %774 = vmatprep.subr.bf16.mxu0 0
    %775 = vmatpush2.bf16.msra.mxu0 0
    %776 = vmatprep.mubr.bf16.mxu0 0
    %777 = vmatmul.mubr.bf16.gmra.mxu0 %v742
    %v778 = vpop.f32.mrf.mxu0
    %v779 = vadd.f32 %v255, %v778
    %v780 = vpop.f32.mrf.mxu0
    %v781 = vpop.f32.mrf.mxu0
    %v782 = vpop.f32.mrf.mxu0
    %783 = vdwg.mxu0
    %v784 = vxor.u32 %v779, 2147483648
    %v785 = vmul.f32 %v784, 1.442695
    %v786 = vpow.pop %v785
    %v787 = vadd.f32 %v786, 1.0
    %v788 = vrcp.pop %v787
    %v789 = vmul.f32 1.0, %v788
    %v790 = vmul.f32 %v789, 2.0
    %v791 = vsub.f32 %v790, 1.0
    %v792 = vmul.f32 %v789, %v649
    %794 = vrot.lane.b32.xlu0 %v791, 64
    %v795 = vpop.permute.xlu0 %794
    %v797 = vmul.f32 %v789, %v795
    %799 = vrot.lane.b32.xlu0 %v797, 32
    %v800 = vpop.permute.xlu0 %799
    %v802 = vadd.f32 %v792, %v800
    %v803 = vtanh.pop %v802
    %805 = vrot.lane.b32.xlu0 %v803, 64
    %v806 = vpop.permute.xlu0 %805
    %v808 = vmul.f32 %v789, %v806
    %vm809 = vcmp.eq.s32.totalorder %v163, 4
    %v810 = vsel %vm809, %v808, %v657
    %v811 = vpack.c.bf16 %v730, %v730
    %813 = vrot.lane.b32.xlu0 %v811, 32
    %v814 = vpop.permute.xlu0 %813
    %v816 = vsel %vm82, %v814, 0
    %818 = vmatprep.subr.bf16.mxu0 0
    %819 = vmatpush1.bf16.msra.mxu0 0
    %820 = vmatprep.subr.bf16.mxu0 0
    %821 = vmatpush1.bf16.msra.mxu0 0
    %822 = vmatprep.subr.bf16.mxu0 0
    %823 = vmatpush1.bf16.msra.mxu0 0
    %824 = vmatprep.subr.bf16.mxu0 0
    %825 = vmatpush1.bf16.msra.mxu0 0
    %826 = vmatprep.subr.bf16.mxu0 0
    %827 = vmatpush1.bf16.msra.mxu0 0
    %828 = vmatprep.subr.bf16.mxu0 0
    %829 = vmatpush1.bf16.msra.mxu0 0
    %830 = vmatprep.subr.bf16.mxu0 0
    %831 = vmatpush1.bf16.msra.mxu0 %v173
    %832 = vmatprep.subr.bf16.mxu0 0
    %833 = vmatpush1.bf16.msra.mxu0 %v172
    %834 = vmatprep.subr.bf16.mxu0 0
    %835 = vmatpush2.bf16.msra.mxu0 0
    %836 = vmatprep.subr.bf16.mxu0 0
    %837 = vmatpush2.bf16.msra.mxu0 0
    %838 = vmatprep.subr.bf16.mxu0 0
    %839 = vmatpush2.bf16.msra.mxu0 0
    %840 = vmatprep.subr.bf16.mxu0 0
    %841 = vmatpush2.bf16.msra.mxu0 0
    %842 = vmatprep.subr.bf16.mxu0 0
    %843 = vmatpush2.bf16.msra.mxu0 0
    %844 = vmatprep.subr.bf16.mxu0 0
    %845 = vmatpush2.bf16.msra.mxu0 0
    %846 = vmatprep.subr.bf16.mxu0 0
    %847 = vmatpush2.bf16.msra.mxu0 0
    %848 = vmatprep.subr.bf16.mxu0 0
    %849 = vmatpush2.bf16.msra.mxu0 0
    %850 = vmatprep.mubr.bf16.mxu0 0
    %851 = vmatmul.mubr.bf16.gmra.mxu0 %v816
    %v852 = vpop.f32.mrf.mxu0
    %v853 = vadd.f32 0.0, %v852
    %v854 = vpop.f32.mrf.mxu0
    %v855 = vpop.f32.mrf.mxu0
    %v856 = vpop.f32.mrf.mxu0
    %857 = vdwg.mxu0
    %v858 = vadd.f32 %v146, %v853
    %v859 = vxor.u32 %v858, 2147483648
    %v860 = vmul.f32 %v859, 1.442695
    %v861 = vpow.pop %v860
    %v862 = vadd.f32 %v861, 1.0
    %v863 = vrcp.pop %v862
    %v864 = vmul.f32 1.0, %v863
    %v865 = vmul.f32 %v864, 2.0
    %v866 = vsub.f32 %v865, 1.0
    %v867 = vmul.f32 %v864, %v724
    %869 = vrot.lane.b32.xlu0 %v866, 64
    %v870 = vpop.permute.xlu0 %869
    %v872 = vmul.f32 %v864, %v870
    %874 = vrot.lane.b32.xlu0 %v872, 32
    %v875 = vpop.permute.xlu0 %874
    %v877 = vadd.f32 %v867, %v875
    %v878 = vtanh.pop %v877
    %880 = vrot.lane.b32.xlu0 %v878, 64
    %v881 = vpop.permute.xlu0 %880
    %v883 = vmul.f32 %v864, %v881
    %885 = vrot.lane.b32.xlu0 %v883, 32
    %v886 = vpop.permute.xlu0 %885
    %889 = vrot.lane.b32.xlu0 %v808, 64
    %v890 = vpop.permute.xlu0 %889
    %v892 = vsel %vm82, %v886, %v890
    %v893 = vpack.c.bf16 %v892, %v892
    %v895 = vsel %vm281, %v893, 0
    %897 = vmatprep.subr.bf16.mxu0 0
    %898 = vmatpush1.bf16.msra.mxu0 0
    %899 = vmatprep.subr.bf16.mxu0 0
    %900 = vmatpush1.bf16.msra.mxu0 0
    %901 = vmatprep.subr.bf16.mxu0 0
    %902 = vmatpush1.bf16.msra.mxu0 0
    %903 = vmatprep.subr.bf16.mxu0 0
    %904 = vmatpush1.bf16.msra.mxu0 0
    %905 = vmatprep.subr.bf16.mxu0 0
    %906 = vmatpush1.bf16.msra.mxu0 %v276
    %907 = vmatprep.subr.bf16.mxu0 0
    %908 = vmatpush1.bf16.msra.mxu0 %v275
    %909 = vmatprep.subr.bf16.mxu0 0
    %910 = vmatpush1.bf16.msra.mxu0 %v274
    %911 = vmatprep.subr.bf16.mxu0 0
    %912 = vmatpush1.bf16.msra.mxu0 %v273
    %913 = vmatprep.subr.bf16.mxu0 0
    %914 = vmatpush2.bf16.msra.mxu0 0
    %915 = vmatprep.subr.bf16.mxu0 0
    %916 = vmatpush2.bf16.msra.mxu0 0
    %917 = vmatprep.subr.bf16.mxu0 0
    %918 = vmatpush2.bf16.msra.mxu0 0
    %919 = vmatprep.subr.bf16.mxu0 0
    %920 = vmatpush2.bf16.msra.mxu0 0
    %921 = vmatprep.subr.bf16.mxu0 0
    %922 = vmatpush2.bf16.msra.mxu0 0
    %923 = vmatprep.subr.bf16.mxu0 0
    %924 = vmatpush2.bf16.msra.mxu0 0
    %925 = vmatprep.subr.bf16.mxu0 0
    %926 = vmatpush2.bf16.msra.mxu0 0
    %927 = vmatprep.subr.bf16.mxu0 0
    %928 = vmatpush2.bf16.msra.mxu0 0
    %929 = vmatprep.mubr.bf16.mxu0 0
    %930 = vmatmul.mubr.bf16.gmra.mxu0 %v895
    %v931 = vpop.f32.mrf.mxu0
    %v932 = vadd.f32 %v255, %v931
    %v933 = vpop.f32.mrf.mxu0
    %v934 = vpop.f32.mrf.mxu0
    %v935 = vpop.f32.mrf.mxu0
    %936 = vdwg.mxu0
    %v937 = vxor.u32 %v932, 2147483648
    %v938 = vmul.f32 %v937, 1.442695
    %v939 = vpow.pop %v938
    %v940 = vadd.f32 %v939, 1.0
    %v941 = vrcp.pop %v940
    %v942 = vmul.f32 1.0, %v941
    %v943 = vmul.f32 %v942, 2.0
    %v944 = vsub.f32 %v943, 1.0
    %v945 = vmul.f32 %v942, %v802
    %947 = vrot.lane.b32.xlu0 %v944, 64
    %v948 = vpop.permute.xlu0 %947
    %v950 = vmul.f32 %v942, %v948
    %952 = vrot.lane.b32.xlu0 %v950, 32
    %v953 = vpop.permute.xlu0 %952
    %v955 = vadd.f32 %v945, %v953
    %v956 = vtanh.pop %v955
    %958 = vrot.lane.b32.xlu0 %v956, 64
    %v959 = vpop.permute.xlu0 %958
    %v961 = vmul.f32 %v942, %v959
    %vm962 = vcmp.eq.s32.totalorder %v163, 5
    %v963 = vsel %vm962, %v961, %v810
    %v964 = vpack.c.bf16 %v883, %v883
    %966 = vrot.lane.b32.xlu0 %v964, 32
    %v967 = vpop.permute.xlu0 %966
    %v969 = vsel %vm82, %v967, 0
    %971 = vmatprep.subr.bf16.mxu0 0
    %972 = vmatpush1.bf16.msra.mxu0 0
    %973 = vmatprep.subr.bf16.mxu0 0
    %974 = vmatpush1.bf16.msra.mxu0 0
    %975 = vmatprep.subr.bf16.mxu0 0
    %976 = vmatpush1.bf16.msra.mxu0 0
    %977 = vmatprep.subr.bf16.mxu0 0
    %978 = vmatpush1.bf16.msra.mxu0 0
    %979 = vmatprep.subr.bf16.mxu0 0
    %980 = vmatpush1.bf16.msra.mxu0 0
    %981 = vmatprep.subr.bf16.mxu0 0
    %982 = vmatpush1.bf16.msra.mxu0 0
    %983 = vmatprep.subr.bf16.mxu0 0
    %984 = vmatpush1.bf16.msra.mxu0 %v173
    %985 = vmatprep.subr.bf16.mxu0 0
    %986 = vmatpush1.bf16.msra.mxu0 %v172
    %987 = vmatprep.subr.bf16.mxu0 0
    %988 = vmatpush2.bf16.msra.mxu0 0
    %989 = vmatprep.subr.bf16.mxu0 0
    %990 = vmatpush2.bf16.msra.mxu0 0
    %991 = vmatprep.subr.bf16.mxu0 0
    %992 = vmatpush2.bf16.msra.mxu0 0
    %993 = vmatprep.subr.bf16.mxu0 0
    %994 = vmatpush2.bf16.msra.mxu0 0
    %995 = vmatprep.subr.bf16.mxu0 0
    %996 = vmatpush2.bf16.msra.mxu0 0
    %997 = vmatprep.subr.bf16.mxu0 0
    %998 = vmatpush2.bf16.msra.mxu0 0
    %999 = vmatprep.subr.bf16.mxu0 0
    %1000 = vmatpush2.bf16.msra.mxu0 0
    %1001 = vmatprep.subr.bf16.mxu0 0
    %1002 = vmatpush2.bf16.msra.mxu0 0
    %1003 = vmatprep.mubr.bf16.mxu0 0
    %1004 = vmatmul.mubr.bf16.gmra.mxu0 %v969
    %v1005 = vpop.f32.mrf.mxu0
    %v1006 = vadd.f32 0.0, %v1005
    %v1007 = vpop.f32.mrf.mxu0
    %v1008 = vpop.f32.mrf.mxu0
    %v1009 = vpop.f32.mrf.mxu0
    %1010 = vdwg.mxu0
    %v1011 = vadd.f32 %v149, %v1006
    %v1012 = vxor.u32 %v1011, 2147483648
    %v1013 = vmul.f32 %v1012, 1.442695
    %v1014 = vpow.pop %v1013
    %v1015 = vadd.f32 %v1014, 1.0
    %v1016 = vrcp.pop %v1015
    %v1017 = vmul.f32 1.0, %v1016
    %v1018 = vmul.f32 %v1017, 2.0
    %v1019 = vsub.f32 %v1018, 1.0
    %v1020 = vmul.f32 %v1017, %v877
    %1022 = vrot.lane.b32.xlu0 %v1019, 64
    %v1023 = vpop.permute.xlu0 %1022
    %v1025 = vmul.f32 %v1017, %v1023
    %1027 = vrot.lane.b32.xlu0 %v1025, 32
    %v1028 = vpop.permute.xlu0 %1027
    %v1030 = vadd.f32 %v1020, %v1028
    %v1031 = vtanh.pop %v1030
    %1033 = vrot.lane.b32.xlu0 %v1031, 64
    %v1034 = vpop.permute.xlu0 %1033
    %v1036 = vmul.f32 %v1017, %v1034
    %1038 = vrot.lane.b32.xlu0 %v1036, 32
    %v1039 = vpop.permute.xlu0 %1038
    %1042 = vrot.lane.b32.xlu0 %v961, 64
    %v1043 = vpop.permute.xlu0 %1042
    %v1045 = vsel %vm82, %v1039, %v1043
    %v1046 = vpack.c.bf16 %v1045, %v1045
    %v1048 = vsel %vm281, %v1046, 0
    %1050 = vmatprep.subr.bf16.mxu0 0
    %1051 = vmatpush1.bf16.msra.mxu0 0
    %1052 = vmatprep.subr.bf16.mxu0 0
    %1053 = vmatpush1.bf16.msra.mxu0 0
    %1054 = vmatprep.subr.bf16.mxu0 0
    %1055 = vmatpush1.bf16.msra.mxu0 0
    %1056 = vmatprep.subr.bf16.mxu0 0
    %1057 = vmatpush1.bf16.msra.mxu0 0
    %1058 = vmatprep.subr.bf16.mxu0 0
    %1059 = vmatpush1.bf16.msra.mxu0 %v276
    %1060 = vmatprep.subr.bf16.mxu0 0
    %1061 = vmatpush1.bf16.msra.mxu0 %v275
    %1062 = vmatprep.subr.bf16.mxu0 0
    %1063 = vmatpush1.bf16.msra.mxu0 %v274
    %1064 = vmatprep.subr.bf16.mxu0 0
    %1065 = vmatpush1.bf16.msra.mxu0 %v273
    %1066 = vmatprep.subr.bf16.mxu0 0
    %1067 = vmatpush2.bf16.msra.mxu0 0
    %1068 = vmatprep.subr.bf16.mxu0 0
    %1069 = vmatpush2.bf16.msra.mxu0 0
    %1070 = vmatprep.subr.bf16.mxu0 0
    %1071 = vmatpush2.bf16.msra.mxu0 0
    %1072 = vmatprep.subr.bf16.mxu0 0
    %1073 = vmatpush2.bf16.msra.mxu0 0
    %1074 = vmatprep.subr.bf16.mxu0 0
    %1075 = vmatpush2.bf16.msra.mxu0 0
    %1076 = vmatprep.subr.bf16.mxu0 0
    %1077 = vmatpush2.bf16.msra.mxu0 0
    %1078 = vmatprep.subr.bf16.mxu0 0
    %1079 = vmatpush2.bf16.msra.mxu0 0
    %1080 = vmatprep.subr.bf16.mxu0 0
    %1081 = vmatpush2.bf16.msra.mxu0 0
    %1082 = vmatprep.mubr.bf16.mxu0 0
    %1083 = vmatmul.mubr.bf16.gmra.mxu0 %v1048
    %v1084 = vpop.f32.mrf.mxu0
    %v1085 = vadd.f32 %v255, %v1084
    %v1086 = vpop.f32.mrf.mxu0
    %v1087 = vpop.f32.mrf.mxu0
    %v1088 = vpop.f32.mrf.mxu0
    %1089 = vdwg.mxu0
    %v1090 = vxor.u32 %v1085, 2147483648
    %v1091 = vmul.f32 %v1090, 1.442695
    %v1092 = vpow.pop %v1091
    %v1093 = vadd.f32 %v1092, 1.0
    %v1094 = vrcp.pop %v1093
    %v1095 = vmul.f32 1.0, %v1094
    %v1096 = vmul.f32 %v1095, 2.0
    %v1097 = vsub.f32 %v1096, 1.0
    %v1098 = vmul.f32 %v1095, %v955
    %1100 = vrot.lane.b32.xlu0 %v1097, 64
    %v1101 = vpop.permute.xlu0 %1100
    %v1103 = vmul.f32 %v1095, %v1101
    %1105 = vrot.lane.b32.xlu0 %v1103, 32
    %v1106 = vpop.permute.xlu0 %1105
    %v1108 = vadd.f32 %v1098, %v1106
    %v1109 = vtanh.pop %v1108
    %1111 = vrot.lane.b32.xlu0 %v1109, 64
    %v1112 = vpop.permute.xlu0 %1111
    %v1114 = vmul.f32 %v1095, %v1112
    %vm1115 = vcmp.eq.s32.totalorder %v163, 6
    %v1116 = vsel %vm1115, %v1114, %v963
    %v1117 = vpack.c.bf16 %v1036, %v1036
    %1119 = vrot.lane.b32.xlu0 %v1117, 32
    %v1120 = vpop.permute.xlu0 %1119
    %v1122 = vsel %vm82, %v1120, 0
    %1124 = vmatprep.subr.bf16.mxu0 0
    %1125 = vmatpush1.bf16.msra.mxu0 0
    %1126 = vmatprep.subr.bf16.mxu0 0
    %1127 = vmatpush1.bf16.msra.mxu0 0
    %1128 = vmatprep.subr.bf16.mxu0 0
    %1129 = vmatpush1.bf16.msra.mxu0 0
    %1130 = vmatprep.subr.bf16.mxu0 0
    %1131 = vmatpush1.bf16.msra.mxu0 0
    %1132 = vmatprep.subr.bf16.mxu0 0
    %1133 = vmatpush1.bf16.msra.mxu0 0
    %1134 = vmatprep.subr.bf16.mxu0 0
    %1135 = vmatpush1.bf16.msra.mxu0 0
    %1136 = vmatprep.subr.bf16.mxu0 0
    %1137 = vmatpush1.bf16.msra.mxu0 %v173
    %1138 = vmatprep.subr.bf16.mxu0 0
    %1139 = vmatpush1.bf16.msra.mxu0 %v172
    %1140 = vmatprep.subr.bf16.mxu0 0
    %1141 = vmatpush2.bf16.msra.mxu0 0
    %1142 = vmatprep.subr.bf16.mxu0 0
    %1143 = vmatpush2.bf16.msra.mxu0 0
    %1144 = vmatprep.subr.bf16.mxu0 0
    %1145 = vmatpush2.bf16.msra.mxu0 0
    %1146 = vmatprep.subr.bf16.mxu0 0
    %1147 = vmatpush2.bf16.msra.mxu0 0
    %1148 = vmatprep.subr.bf16.mxu0 0
    %1149 = vmatpush2.bf16.msra.mxu0 0
    %1150 = vmatprep.subr.bf16.mxu0 0
    %1151 = vmatpush2.bf16.msra.mxu0 0
    %1152 = vmatprep.subr.bf16.mxu0 0
    %1153 = vmatpush2.bf16.msra.mxu0 0
    %1154 = vmatprep.subr.bf16.mxu0 0
    %1155 = vmatpush2.bf16.msra.mxu0 0
    %1156 = vmatprep.mubr.bf16.mxu0 0
    %1157 = vmatmul.mubr.bf16.gmra.mxu0 %v1122
    %v1158 = vpop.f32.mrf.mxu0
    %v1159 = vadd.f32 0.0, %v1158
    %v1160 = vpop.f32.mrf.mxu0
    %v1161 = vpop.f32.mrf.mxu0
    %v1162 = vpop.f32.mrf.mxu0
    %1163 = vdwg.mxu0
    %v1164 = vadd.f32 %v154, %v1159
    %v1165 = vxor.u32 %v1164, 2147483648
    %v1166 = vmul.f32 %v1165, 1.442695
    %v1167 = vpow.pop %v1166
    %v1168 = vadd.f32 %v1167, 1.0
    %v1169 = vrcp.pop %v1168
    %v1170 = vmul.f32 1.0, %v1169
    %v1171 = vmul.f32 %v1170, 2.0
    %v1172 = vsub.f32 %v1171, 1.0
    %v1173 = vmul.f32 %v1170, %v1030
    %1175 = vrot.lane.b32.xlu0 %v1172, 64
    %v1176 = vpop.permute.xlu0 %1175
    %v1178 = vmul.f32 %v1170, %v1176
    %1180 = vrot.lane.b32.xlu0 %v1178, 32
    %v1181 = vpop.permute.xlu0 %1180
    %v1183 = vadd.f32 %v1173, %v1181
    %v1184 = vtanh.pop %v1183
    %1186 = vrot.lane.b32.xlu0 %v1184, 64
    %v1187 = vpop.permute.xlu0 %1186
    %v1189 = vmul.f32 %v1170, %v1187
    %1191 = vrot.lane.b32.xlu0 %v1189, 32
    %v1192 = vpop.permute.xlu0 %1191
    %1195 = vrot.lane.b32.xlu0 %v1114, 64
    %v1196 = vpop.permute.xlu0 %1195
    %v1198 = vsel %vm82, %v1192, %v1196
    %v1199 = vpack.c.bf16 %v1198, %v1198
    %v1201 = vsel %vm281, %v1199, 0
    %1203 = vmatprep.subr.bf16.mxu0 0
    %1204 = vmatpush1.bf16.msra.mxu0 0
    %1205 = vmatprep.subr.bf16.mxu0 0
    %1206 = vmatpush1.bf16.msra.mxu0 0
    %1207 = vmatprep.subr.bf16.mxu0 0
    %1208 = vmatpush1.bf16.msra.mxu0 0
    %1209 = vmatprep.subr.bf16.mxu0 0
    %1210 = vmatpush1.bf16.msra.mxu0 0
    %1211 = vmatprep.subr.bf16.mxu0 0
    %1212 = vmatpush1.bf16.msra.mxu0 %v276
    %1213 = vmatprep.subr.bf16.mxu0 0
    %1214 = vmatpush1.bf16.msra.mxu0 %v275
    %1215 = vmatprep.subr.bf16.mxu0 0
    %1216 = vmatpush1.bf16.msra.mxu0 %v274
    %1217 = vmatprep.subr.bf16.mxu0 0
    %1218 = vmatpush1.bf16.msra.mxu0 %v273
    %1219 = vmatprep.subr.bf16.mxu0 0
    %1220 = vmatpush2.bf16.msra.mxu0 0
    %1221 = vmatprep.subr.bf16.mxu0 0
    %1222 = vmatpush2.bf16.msra.mxu0 0
    %1223 = vmatprep.subr.bf16.mxu0 0
    %1224 = vmatpush2.bf16.msra.mxu0 0
    %1225 = vmatprep.subr.bf16.mxu0 0
    %1226 = vmatpush2.bf16.msra.mxu0 0
    %1227 = vmatprep.subr.bf16.mxu0 0
    %1228 = vmatpush2.bf16.msra.mxu0 0
    %1229 = vmatprep.subr.bf16.mxu0 0
    %1230 = vmatpush2.bf16.msra.mxu0 0
    %1231 = vmatprep.subr.bf16.mxu0 0
    %1232 = vmatpush2.bf16.msra.mxu0 0
    %1233 = vmatprep.subr.bf16.mxu0 0
    %1234 = vmatpush2.bf16.msra.mxu0 0
    %1235 = vmatprep.mubr.bf16.mxu0 0
    %1236 = vmatmul.mubr.bf16.gmra.mxu0 %v1201
    %v1237 = vpop.f32.mrf.mxu0
    %v1238 = vadd.f32 %v255, %v1237
    %v1239 = vpop.f32.mrf.mxu0
    %v1240 = vpop.f32.mrf.mxu0
    %v1241 = vpop.f32.mrf.mxu0
    %1242 = vdwg.mxu0
    %v1243 = vxor.u32 %v1238, 2147483648
    %v1244 = vmul.f32 %v1243, 1.442695
    %v1245 = vpow.pop %v1244
    %v1246 = vadd.f32 %v1245, 1.0
    %v1247 = vrcp.pop %v1246
    %v1248 = vmul.f32 1.0, %v1247
    %v1249 = vmul.f32 %v1248, 2.0
    %v1250 = vsub.f32 %v1249, 1.0
    %v1251 = vmul.f32 %v1248, %v1108
    %1253 = vrot.lane.b32.xlu0 %v1250, 64
    %v1254 = vpop.permute.xlu0 %1253
    %v1256 = vmul.f32 %v1248, %v1254
    %1258 = vrot.lane.b32.xlu0 %v1256, 32
    %v1259 = vpop.permute.xlu0 %1258
    %v1261 = vadd.f32 %v1251, %v1259
    %v1262 = vtanh.pop %v1261
    %1264 = vrot.lane.b32.xlu0 %v1262, 64
    %v1265 = vpop.permute.xlu0 %1264
    %v1267 = vmul.f32 %v1248, %v1265
    %vm1268 = vcmp.eq.s32.totalorder %v163, 7
    %v1269 = vsel %vm1268, %v1267, %v1116
    %v1270 = vpack.c.bf16 %v1189, %v1189
    %1272 = vrot.lane.b32.xlu0 %v1270, 32
    %v1273 = vpop.permute.xlu0 %1272
    %v1275 = vsel %vm82, %v1273, 0
    %1277 = vmatprep.subr.bf16.mxu0 0
    %1278 = vmatpush1.bf16.msra.mxu0 0
    %1279 = vmatprep.subr.bf16.mxu0 0
    %1280 = vmatpush1.bf16.msra.mxu0 0
    %1281 = vmatprep.subr.bf16.mxu0 0
    %1282 = vmatpush1.bf16.msra.mxu0 0
    %1283 = vmatprep.subr.bf16.mxu0 0
    %1284 = vmatpush1.bf16.msra.mxu0 0
    %1285 = vmatprep.subr.bf16.mxu0 0
    %1286 = vmatpush1.bf16.msra.mxu0 0
    %1287 = vmatprep.subr.bf16.mxu0 0
    %1288 = vmatpush1.bf16.msra.mxu0 0
    %1289 = vmatprep.subr.bf16.mxu0 0
    %1290 = vmatpush1.bf16.msra.mxu0 %v173
    %1291 = vmatprep.subr.bf16.mxu0 0
    %1292 = vmatpush1.bf16.msra.mxu0 %v172
    %1293 = vmatprep.subr.bf16.mxu0 0
    %1294 = vmatpush2.bf16.msra.mxu0 0
    %1295 = vmatprep.subr.bf16.mxu0 0
    %1296 = vmatpush2.bf16.msra.mxu0 0
    %1297 = vmatprep.subr.bf16.mxu0 0
    %1298 = vmatpush2.bf16.msra.mxu0 0
    %1299 = vmatprep.subr.bf16.mxu0 0
    %1300 = vmatpush2.bf16.msra.mxu0 0
    %1301 = vmatprep.subr.bf16.mxu0 0
    %1302 = vmatpush2.bf16.msra.mxu0 0
    %1303 = vmatprep.subr.bf16.mxu0 0
    %1304 = vmatpush2.bf16.msra.mxu0 0
    %1305 = vmatprep.subr.bf16.mxu0 0
    %1306 = vmatpush2.bf16.msra.mxu0 0
    %1307 = vmatprep.subr.bf16.mxu0 0
    %1308 = vmatpush2.bf16.msra.mxu0 0
    %1309 = vmatprep.mubr.bf16.mxu0 0
    %1310 = vmatmul.mubr.bf16.gmra.mxu0 %v1275
    %v1311 = vpop.f32.mrf.mxu0
    %v1312 = vadd.f32 0.0, %v1311
    %v1313 = vpop.f32.mrf.mxu0
    %v1314 = vpop.f32.mrf.mxu0
    %v1315 = vpop.f32.mrf.mxu0
    %1316 = vdwg.mxu0
    %v1317 = vadd.f32 %v157, %v1312
    %v1318 = vxor.u32 %v1317, 2147483648
    %v1319 = vmul.f32 %v1318, 1.442695
    %v1320 = vpow.pop %v1319
    %v1321 = vadd.f32 %v1320, 1.0
    %v1322 = vrcp.pop %v1321
    %v1323 = vmul.f32 1.0, %v1322
    %v1324 = vmul.f32 %v1323, 2.0
    %v1325 = vsub.f32 %v1324, 1.0
    %v1326 = vmul.f32 %v1323, %v1183
    %1328 = vrot.lane.b32.xlu0 %v1325, 64
    %v1329 = vpop.permute.xlu0 %1328
    %v1331 = vmul.f32 %v1323, %v1329
    %1333 = vrot.lane.b32.xlu0 %v1331, 32
    %v1334 = vpop.permute.xlu0 %1333
    %v1336 = vadd.f32 %v1326, %v1334
    %v1337 = vtanh.pop %v1336
    %1339 = vrot.lane.b32.xlu0 %v1337, 64
    %v1340 = vpop.permute.xlu0 %1339
    %v1342 = vmul.f32 %v1323, %v1340
    %1344 = vrot.lane.b32.xlu0 %v1342, 32
    %v1345 = vpop.permute.xlu0 %1344
    %1348 = vrot.lane.b32.xlu0 %v1267, 64
    %v1349 = vpop.permute.xlu0 %1348
    %v1351 = vsel %vm82, %v1345, %v1349
    %v1352 = vpack.c.bf16 %v1351, %v1351
    %v1354 = vsel %vm281, %v1352, 0
    %1356 = vmatprep.subr.bf16.mxu0 0
    %1357 = vmatpush1.bf16.msra.mxu0 0
    %1358 = vmatprep.subr.bf16.mxu0 0
    %1359 = vmatpush1.bf16.msra.mxu0 0
    %1360 = vmatprep.subr.bf16.mxu0 0
    %1361 = vmatpush1.bf16.msra.mxu0 0
    %1362 = vmatprep.subr.bf16.mxu0 0
    %1363 = vmatpush1.bf16.msra.mxu0 0
    %1364 = vmatprep.subr.bf16.mxu0 0
    %1365 = vmatpush1.bf16.msra.mxu0 %v276
    %1366 = vmatprep.subr.bf16.mxu0 0
    %1367 = vmatpush1.bf16.msra.mxu0 %v275
    %1368 = vmatprep.subr.bf16.mxu0 0
    %1369 = vmatpush1.bf16.msra.mxu0 %v274
    %1370 = vmatprep.subr.bf16.mxu0 0
    %1371 = vmatpush1.bf16.msra.mxu0 %v273
    %1372 = vmatprep.subr.bf16.mxu0 0
    %1373 = vmatpush2.bf16.msra.mxu0 0
    %1374 = vmatprep.subr.bf16.mxu0 0
    %1375 = vmatpush2.bf16.msra.mxu0 0
    %1376 = vmatprep.subr.bf16.mxu0 0
    %1377 = vmatpush2.bf16.msra.mxu0 0
    %1378 = vmatprep.subr.bf16.mxu0 0
    %1379 = vmatpush2.bf16.msra.mxu0 0
    %1380 = vmatprep.subr.bf16.mxu0 0
    %1381 = vmatpush2.bf16.msra.mxu0 0
    %1382 = vmatprep.subr.bf16.mxu0 0
    %1383 = vmatpush2.bf16.msra.mxu0 0
    %1384 = vmatprep.subr.bf16.mxu0 0
    %1385 = vmatpush2.bf16.msra.mxu0 0
    %1386 = vmatprep.subr.bf16.mxu0 0
    %1387 = vmatpush2.bf16.msra.mxu0 0
    %1388 = vmatprep.mubr.bf16.mxu0 0
    %1389 = vmatmul.mubr.bf16.gmra.mxu0 %v1354
    %v1390 = vpop.f32.mrf.mxu0
    %v1391 = vadd.f32 %v255, %v1390
    %v1392 = vpop.f32.mrf.mxu0
    %v1393 = vpop.f32.mrf.mxu0
    %v1394 = vpop.f32.mrf.mxu0
    %1395 = vdwg.mxu0
    %v1396 = vxor.u32 %v1391, 2147483648
    %v1397 = vmul.f32 %v1396, 1.442695
    %v1398 = vpow.pop %v1397
    %v1399 = vadd.f32 %v1398, 1.0
    %v1400 = vrcp.pop %v1399
    %v1401 = vmul.f32 1.0, %v1400
    %v1402 = vmul.f32 %v1401, 2.0
    %v1403 = vsub.f32 %v1402, 1.0
    %v1404 = vmul.f32 %v1401, %v1261
    %1406 = vrot.lane.b32.xlu0 %v1403, 64
    %v1407 = vpop.permute.xlu0 %1406
    %v1409 = vmul.f32 %v1401, %v1407
    %1411 = vrot.lane.b32.xlu0 %v1409, 32
    %v1412 = vpop.permute.xlu0 %1411
    %v1414 = vadd.f32 %v1404, %v1412
    %v1415 = vtanh.pop %v1414
    %1417 = vrot.lane.b32.xlu0 %v1415, 64
    %v1418 = vpop.permute.xlu0 %1417
    %v1420 = vmul.f32 %v1401, %v1418
    %vm1421 = vcmp.eq.s32.totalorder %v163, 8
    %v1422 = vsel %vm1421, %v1420, %v1269
    %v1423 = vmul.f32 %v1422, 0.5
    %v1424 = vmul.f32 %v1422, 0.70710677
    %v1425 = verf.f32.pop %v1424
    %v1426 = vadd.f32 %v1425, 1.0
    %v1427 = vmul.f32 %v1423, %v1426
    %v1428 = vpack.c.bf16 %v1427, %v1427
    %v1429 = vld [vmem:[%s7] sm:$0xf]
    %v1430 = vld [vmem:[%s7 + $0x4] sm:$0xf]
    %v1431 = vld [vmem:[%s7 + $0x8] sm:$0xf]
    %v1432 = vld [vmem:[%s7 + $0xc] sm:$0xf]
    %v1433 = vld [vmem:[%s8] sm:$0x1]
    %v1435 = vlaneseq
    %v1436 = vshrl.u32 %v1435, 7
    %v1437 = vsub.s32 0, %v1436
    %v1438 = vrot.slane %v1433, %v1437
    %1441 = vrot.lane.b32.xlu0 %v1428, 32
    %v1442 = vpop.permute.xlu0 %1441
    %v1447 = vunpack.c.l.b16 %v1429
    %v1448 = vunpack.c.l.b16 %v1430
    %v1449 = vunpack.c.l.b16 %v1431
    %v1450 = vunpack.c.l.b16 %v1432
    %v1451 = vpack.c.b16 %v1448, %v1447
    %v1452 = vpack.c.b16 %v1450, %v1449
    %v1456 = vsel %vm82, %v1442, 0
    %1458 = vmatprep.subr.bf16.mxu0 0
    %1459 = vmatpush1.bf16.msra.mxu0 0
    %1460 = vmatprep.subr.bf16.mxu0 0
    %1461 = vmatpush1.bf16.msra.mxu0 0
    %1462 = vmatprep.subr.bf16.mxu0 0
    %1463 = vmatpush1.bf16.msra.mxu0 0
    %1464 = vmatprep.subr.bf16.mxu0 0
    %1465 = vmatpush1.bf16.msra.mxu0 0
    %1466 = vmatprep.subr.bf16.mxu0 0
    %1467 = vmatpush1.bf16.msra.mxu0 0
    %1468 = vmatprep.subr.bf16.mxu0 0
    %1469 = vmatpush1.bf16.msra.mxu0 0
    %1470 = vmatprep.subr.bf16.mxu0 0
    %1471 = vmatpush1.bf16.msra.mxu0 %v1452
    %1472 = vmatprep.subr.bf16.mxu0 0
    %1473 = vmatpush1.bf16.msra.mxu0 %v1451
    %1474 = vmatprep.subr.bf16.mxu0 0
    %1475 = vmatpush2.bf16.msra.mxu0 0
    %1476 = vmatprep.subr.bf16.mxu0 0
    %1477 = vmatpush2.bf16.msra.mxu0 0
    %1478 = vmatprep.subr.bf16.mxu0 0
    %1479 = vmatpush2.bf16.msra.mxu0 0
    %1480 = vmatprep.subr.bf16.mxu0 0
    %1481 = vmatpush2.bf16.msra.mxu0 0
    %1482 = vmatprep.subr.bf16.mxu0 0
    %1483 = vmatpush2.bf16.msra.mxu0 0
    %1484 = vmatprep.subr.bf16.mxu0 0
    %1485 = vmatpush2.bf16.msra.mxu0 0
    %1486 = vmatprep.subr.bf16.mxu0 0
    %1487 = vmatpush2.bf16.msra.mxu0 0
    %1488 = vmatprep.subr.bf16.mxu0 0
    %1489 = vmatpush2.bf16.msra.mxu0 0
    %1490 = vmatprep.mubr.bf16.mxu0 0
    %1491 = vmatmul.mubr.bf16.gmra.mxu0 %v1456
    %v1492 = vpop.f32.mrf.mxu0
    %v1493 = vadd.f32 %v1438, %v1492
    %v1494 = vpop.f32.mrf.mxu0
    %v1495 = vpop.f32.mrf.mxu0
    %v1496 = vpop.f32.mrf.mxu0
    %1497 = vdwg.mxu0
    %v1498 = vsel %vm281, %v1493, -inf
    %1499 = vmax.xlane.f32.xlu0 %v1498
    %v1500 = vpop.xlane.xlu0 %1499
    %v1501 = vsub.f32 %v1493, %v1500
    %v1502 = vmul.f32 %v1501, 1.442695
    %v1503 = vpow.pop %v1502
    %v1504 = vsel %vm281, %v1503, 0.0
    %1505 = vadd.xlane.f32.xlu0 %v1504
    %v1506 = vpop.xlane.xlu0 %1505
    %v1507 = vlog2.pop %v1506
    %v1508 = vmul.f32 %v1507, 0.6931472
    %v1509 = vsub.f32 %v1501, %v1508
    %1510 = vst.msk [vmem:[#allocation2] sm:$0xff] %vm281, %v1509
    // Predicated region
    $region38: #{_forward_core.1} parent=1 // pred_check
      _
    $region39: #{_forward_core.1} parent=1 // pred_check_branch
      %1512 = sbr.rel (0) target = $region41
    $region40: #{_forward_core.1} parent=1 // pred_region
      %s1514 = ssub.s32 128, 128
      %1515 = vsyncadd [#allocation3], %s1514
      %s1517 = sshll.u32 [#allocation2], 4
      %s1518 = int_to_ptr.vmem [resolvable:$true] %s1517
      %1520 = dma.vmem_to_hbm [thread:$0]  %s1518, 128, %s9, [#allocation3]
    $region41: #{_forward_core.1} parent=1 // pred_fallthru
      _
    // Predicated region
    $region42: #{_forward_core.1} parent=1 // pred_check
      _
    $region43: #{_forward_core.1} parent=1 // pred_check_branch
      %1522 = sbr.rel (0) target = $region45
    $region44: #{_forward_core.1} parent=1 // pred_region
      %1523 = dma.done [#allocation3], 128
    $region45: #{_forward_core.1} parent=1 // pred_fallthru
      _
    %1524 = vsyncpa [#allocation3], 1

</llo_original>
